<compile_context>
chip_gen: v7x
topology: tpu7x:2x2x1
jax: 0.10.0
libtpu: 0.0.40
codegen_flags: <defaults>
</compile_context>

<pallas_src>
import functools

import jax
import jax.numpy as jnp
from jax.experimental import pallas as pl
from jax.experimental.pallas import tpu as pltpu


# ----------------------------- Pallas kernel --------------------------------

def _attention_kernel(x_ref, w1_ref, b1_ref, w2_ref, b2_ref, add_ref, o_ref,
                      *, heads, head_dim):
    """One grid step == TB (batch, window) slices.

    x_ref   : (TB, N, C)       input tokens of TB windows (f32)
    w1_ref  : (C, 3C)          qkv projection, pre-transposed, q-cols pre-scaled (bf16)
    b1_ref  : (1, 3C)          q-part pre-scaled (f32)
    w2_ref  : (C, C)           output projection, pre-transposed (bf16)
    b2_ref  : (1, C)           (f32)
    add_ref : (TB, H*N, N)     earth-specific bias + attention mask (f32)
    o_ref   : (TB, N, C)
    """
    TB, N, C = x_ref.shape
    H, hd = heads, head_dim

    # ---- QKV projection on the flattened (TB*N, C) slab: bf16 in, f32 acc ----
    x2 = x_ref[...].reshape(TB * N, C).astype(jnp.bfloat16)
    qkv = jnp.dot(x2, w1_ref[...], preferred_element_type=jnp.float32)
    qkv = qkv + b1_ref[...]                                     # (TB*N, 3C) f32

    # scale already folded into the q columns of w1/b1 (wrapper-side)
    q = qkv[:, :C].astype(jnp.bfloat16).reshape(TB, N, C)
    k = qkv[:, C:2 * C].astype(jnp.bfloat16).reshape(TB, N, C)
    v = qkv[:, 2 * C:].astype(jnp.bfloat16).reshape(TB, N, C)

    # ---- attention scores, batched over the TB windows (per head) ----
    scores = []
    for h in range(H):
        qh = q[:, :, h * hd:(h + 1) * hd]                       # (TB, N, hd)
        kh = k[:, :, h * hd:(h + 1) * hd]
        scores.append(jnp.einsum("bnd,bmd->bnm", qh, kh,
                                 preferred_element_type=jnp.float32))
    s = jnp.concatenate(scores, axis=1)                         # (TB, H*N, N)
    s = s + add_ref[...]                                        # bias + mask (f32)

    # ---- single softmax over all heads/windows of this block (f32) ----
    s = s - jnp.max(s, axis=-1, keepdims=True)
    p = jnp.exp(s)
    p = p * pl.reciprocal(jnp.sum(p, axis=-1, keepdims=True), approx=True)

    # ---- attention @ V, batched over the TB windows (per head) ----
    outs = []
    for h in range(H):
        ph = p[:, h * N:(h + 1) * N, :].astype(jnp.bfloat16)    # (TB, N, N)
        vh = v[:, :, h * hd:(h + 1) * hd]                       # (TB, N, hd)
        outs.append(jnp.einsum("bnm,bmd->bnd", ph, vh,
                               preferred_element_type=jnp.float32))
    out = jnp.concatenate(outs, axis=-1)                        # (TB, N, C) f32

    # ---- output projection on the flattened slab ----
    y = jnp.dot(out.reshape(TB * N, C).astype(jnp.bfloat16), w2_ref[...],
                preferred_element_type=jnp.float32)
    y = y + b2_ref[...]
    o_ref[...] = y.reshape(TB, N, C).astype(o_ref.dtype)


def _choose_block_windows(bw, n, c, h, *, vmem_budget_bytes=6 << 20,
                          max_windows=64):
    """Largest divisor of bw whose rough per-step working set fits the budget
    while keeping grid >= 2 when possible (so the pipeline can overlap)."""
    # rough f32 working set per window incl. double-buffered in/out blocks
    per_window = 4 * (8 * n * c + 6 * h * n * n)
    cap = max(1, min(max_windows, vmem_budget_bytes // per_window))
    divisors = [d for d in range(1, bw + 1) if bw % d == 0]
    good = [d for d in divisors if d <= cap and bw // d >= 2]
    if not good:
        good = [d for d in divisors if d <= cap] or [1]
    return max(good)


def earth_attention_2d_pallas(x, additive, w1_t, b1, w2_t, b2, *, heads, scale,
                              block_windows=None):
    """x: (BW, N, C); additive: (BW, H, N, N) -> (BW, N, C)."""
    BW, N, C = x.shape
    H = heads
    head_dim = C // heads
    TB = (block_windows if block_windows is not None
          else _choose_block_windows(BW, N, C, H))
    assert BW % TB == 0
    G = BW // TB

    # Fold the attention scale into the q-columns of the QKV projection
    # (parameters only, one-time wrapper cost) and cast MXU operands to bf16.
    col_scale = jnp.concatenate([jnp.full((C,), scale, jnp.float32),
                                 jnp.ones((2 * C,), jnp.float32)])
    w1b = (w1_t * col_scale[None, :]).astype(jnp.bfloat16)      # (C, 3C)
    b1s = (b1 * col_scale).reshape(1, -1)                       # (1, 3C) f32
    w2b = w2_t.astype(jnp.bfloat16)                             # (C, C)

    # Flatten (H, N) so the kernel adds the bias+mask with no in-kernel reshape.
    add2 = additive.reshape(BW, H * N, N)

    kernel = functools.partial(_attention_kernel, heads=heads,
                               head_dim=head_dim)

    grid_spec = pltpu.PrefetchScalarGridSpec(
        num_scalar_prefetch=0,
        grid=(G,),
        in_specs=[
            pl.BlockSpec((TB, N, C), lambda g: (g, 0, 0)),       # x
            pl.BlockSpec((C, 3 * C), lambda g: (0, 0)),          # w1 (C, 3C)
            pl.BlockSpec((1, 3 * C), lambda g: (0, 0)),          # b1
            pl.BlockSpec((C, C), lambda g: (0, 0)),              # w2 (C, C)
            pl.BlockSpec((1, C), lambda g: (0, 0)),              # b2
            pl.BlockSpec((TB, H * N, N), lambda g: (g, 0, 0)),   # bias + mask
        ],
        out_specs=pl.BlockSpec((TB, N, C), lambda g: (g, 0, 0)),
    )

    return pl.pallas_call(
        kernel,
        out_shape=jax.ShapeDtypeStruct((BW, N, C), x.dtype),
        grid_spec=grid_spec,
        compiler_params=pltpu.CompilerParams(
            dimension_semantics=("parallel",)),
    )(x, w1b, b1s, w2b, b2.reshape(1, -1), add2)


# --------------------------- plain-JAX glue / setup --------------------------

def construct_position_index(window_size):
    """Exact mirror of EarthAttention2D._construct_index."""
    wlat, wlon = int(window_size[0]), int(window_size[1])
    coords_hi = jnp.arange(wlat)
    coords_hj = -jnp.arange(wlat) * wlat
    coords_w = jnp.arange(wlon)
    coords_1 = jnp.stack(jnp.meshgrid(coords_hi, coords_w, indexing="ij"))
    coords_2 = jnp.stack(jnp.meshgrid(coords_hj, coords_w, indexing="ij"))
    cf1 = coords_1.reshape(2, -1)
    cf2 = coords_2.reshape(2, -1)
    coords = cf1[:, :, None] - cf2[:, None, :]           # (2, N, N)
    coords = jnp.transpose(coords, (1, 2, 0))            # (N, N, 2)
    coords = coords.at[:, :, 1].add(wlon - 1)
    coords = coords.at[:, :, 0].multiply(2 * wlon - 1)
    position_index = jnp.sum(coords, axis=-1)            # (N, N)
    return position_index.reshape(-1)                    # (N*N,)


def build_additive_term(bias_table, position_index, mask, *, BW, heads,
                        window_size, type_of_windows):
    """Earth-specific bias (gathered exactly like the torch code) + mask.

    Returns (BW, heads, N, N).
    """
    wlat, wlon = int(window_size[0]), int(window_size[1])
    N = wlat * wlon
    reps = BW // type_of_windows
    repeated_index = jnp.tile(position_index, reps)                  # (reps*N*N,)
    bias_sel = bias_table[repeated_index]                            # (reps*N*N, T, H)
    bias_r = bias_sel.reshape(N, N, -1, heads)                       # (N, N, BW, H)
    bias4d = jnp.transpose(bias_r, (2, 3, 0, 1))                     # (BW, H, N, N)

    n_windows = mask.shape[0]
    B = BW // n_windows
    mask_add = jnp.broadcast_to(mask[None, :, None, :, :],
                                (B, n_windows, heads, N, N)).reshape(BW, heads, N, N)
    return bias4d + mask_add


def reference_forward(x, additive, w1_t, b1, w2_t, b2, *, heads, scale):
    """Pure-JAX f32 reference of the forward pass (dropout = identity)."""
    BW, N, C = x.shape
    hd = C // heads
    qkv = x @ w1_t + b1                                              # (BW, N, 3C)
    qkv = qkv.reshape(BW, N, 3, heads, hd)
    q, k, v = (jnp.transpose(qkv, (2, 0, 3, 1, 4))[i] for i in range(3))
    q = q * scale
    attn = jnp.einsum("bhnd,bhmd->bhnm", q, k)                       # (BW, H, N, N)
    attn = attn + additive
    attn = jax.nn.softmax(attn, axis=-1)
    out = jnp.einsum("bhnm,bhmd->bhnd", attn, v)                     # (BW, H, N, hd)
    out = jnp.transpose(out, (0, 2, 1, 3)).reshape(BW, N, C)
    return out @ w2_t + b2


# ---------------------------------- main -------------------------------------

if __name__ == "__main__":
    # Small config consistent with the module:
    dim = 32
    heads = 4
    window_size = (4, 4)          # (lat, lon) -> N = 16 patches per window
    input_shape = (8, 8)          # patches in (lat, lon)
    batch = 2

    wlat, wlon = window_size
    N = wlat * wlon
    type_of_windows = input_shape[0] // wlat
    n_windows = (input_shape[0] // wlat) * (input_shape[1] // wlon)
    BW = batch * n_windows
    scale = (dim // heads) ** (-0.5)

    key = jax.random.PRNGKey(0)
    k_x, k_m, k_w1, k_w2, k_b = jax.random.split(key, 5)

    # deterministic parameter init (synthetic; no checkpoint load)
    w1 = jax.random.normal(k_w1, (3 * dim, dim), jnp.float32) * 0.02   # torch Linear weight
    b1 = jnp.zeros((3 * dim,), jnp.float32)
    w2 = jax.random.normal(k_w2, (dim, dim), jnp.float32) * 0.02
    b2 = jnp.zeros((dim,), jnp.float32)
    bias_table = jax.random.truncated_normal(
        k_b, -2.0, 2.0,
        ((2 * wlon - 1) * wlat * wlat, type_of_windows, heads), jnp.float32) * 0.02

    # inputs
    x = jax.random.normal(k_x, (BW, N, dim), jnp.float32)
    mask = jnp.where(jax.random.uniform(k_m, (n_windows, N, N)) < 0.75,
                     0.0, -100.0).astype(jnp.float32)

    # glue: position-index gather of the earth-specific bias + mask broadcast
    position_index = construct_position_index(window_size)
    additive = build_additive_term(bias_table, position_index, mask,
                                   BW=BW, heads=heads, window_size=window_size,
                                   type_of_windows=type_of_windows)

    w1_t = w1.T    # (C, 3C) for kernel
    w2_t = w2.T    # (C, C)

    y = earth_attention_2d_pallas(x, additive, w1_t, b1, w2_t, b2,
                                  heads=heads, scale=scale)
    y = jax.block_until_ready(y)

    y_ref = reference_forward(x, additive, w1_t, b1, w2_t, b2,
                              heads=heads, scale=scale)
    assert y.shape == (BW, N, dim)
    # bf16 MXU operands + approx reciprocal -> loosened tolerance vs pure-f32 ref
    err = float(jnp.max(jnp.abs(y - y_ref)) / (jnp.max(jnp.abs(y_ref)) + 1e-8))
    assert err < 3e-2, f"mismatch vs reference: normalized max err {err:.5f}"

    print("KERNEL_OK")
</pallas_src>

<mosaic_0001>
module attributes {stable_mosaic.version = 11 : i64} {
  func.func @_attention_kernel(%arg0: i32, %arg1: memref<4x16x32xf32, #tpu.memory_space<vmem>>, %arg2: memref<32x96xbf16, #tpu.memory_space<vmem>>, %arg3: memref<1x96xf32, #tpu.memory_space<vmem>>, %arg4: memref<32x32xbf16, #tpu.memory_space<vmem>>, %arg5: memref<1x32xf32, #tpu.memory_space<vmem>>, %arg6: memref<4x64x16xf32, #tpu.memory_space<vmem>>, %arg7: memref<4x16x32xf32, #tpu.memory_space<vmem>>) attributes {dimension_semantics = [#tpu.dimension_semantics<parallel>], iteration_bounds = array<i64: 2>, scalar_prefetch = 0 : i64, scratch_operands = 0 : i64, tpu.core_type = #tpu.core_type<tc>, window_params = [{transform_indices = @transform_0, window_bounds = array<i64: 4, 16, 32>}, {pipeline_mode = #tpu.pipeline_mode<synchronous>, transform_indices = @transform_1, window_bounds = array<i64: 32, 96>}, {pipeline_mode = #tpu.pipeline_mode<synchronous>, transform_indices = @transform_2, window_bounds = array<i64: 1, 96>}, {pipeline_mode = #tpu.pipeline_mode<synchronous>, transform_indices = @transform_3, window_bounds = array<i64: 32, 32>}, {pipeline_mode = #tpu.pipeline_mode<synchronous>, transform_indices = @transform_4, window_bounds = array<i64: 1, 32>}, {transform_indices = @transform_5, window_bounds = array<i64: 4, 64, 16>}, {transform_indices = @transform_6, window_bounds = array<i64: 4, 16, 32>}]} {
    %c0 = arith.constant 0 : index
    %c0_0 = arith.constant 0 : index
    %c0_1 = arith.constant 0 : index
    %0 = vector.load %arg1[%c0, %c0_0, %c0_1] : memref<4x16x32xf32, #tpu.memory_space<vmem>>, vector<4x16x32xf32>
    %1 = vector.shape_cast %0 : vector<4x16x32xf32> to vector<64x32xf32>
    %2 = arith.truncf %1 : vector<64x32xf32> to vector<64x32xbf16>
    %c0_2 = arith.constant 0 : index
    %c0_3 = arith.constant 0 : index
    %3 = vector.load %arg2[%c0_2, %c0_3] : memref<32x96xbf16, #tpu.memory_space<vmem>>, vector<32x96xbf16>
    %cst = arith.constant dense<0.000000e+00> : vector<64x96xf32>
    %4 = tpu.matmul %2, %3, %cst {dimension_numbers = #tpu.dot_dimension_numbers<[1], [0], [0], [1], [0, 0, 1, 1], [], []>} : vector<64x32xbf16>, vector<32x96xbf16>, vector<64x96xf32> -> vector<64x96xf32>
    %c0_4 = arith.constant 0 : index
    %c0_5 = arith.constant 0 : index
    %5 = vector.load %arg3[%c0_4, %c0_5] : memref<1x96xf32, #tpu.memory_space<vmem>>, vector<1x96xf32>
    %6 = vector.broadcast %5 : vector<1x96xf32> to vector<64x96xf32>
    %7 = arith.addf %4, %6 : vector<64x96xf32>
    %8 = vector.extract_strided_slice %7 {offsets = [0, 0], sizes = [64, 32], strides = [1, 1]} : vector<64x96xf32> to vector<64x32xf32>
    %9 = arith.truncf %8 : vector<64x32xf32> to vector<64x32xbf16>
    %10 = vector.shape_cast %9 : vector<64x32xbf16> to vector<4x16x32xbf16>
    %11 = vector.extract_strided_slice %7 {offsets = [0, 32], sizes = [64, 32], strides = [1, 1]} : vector<64x96xf32> to vector<64x32xf32>
    %12 = arith.truncf %11 : vector<64x32xf32> to vector<64x32xbf16>
    %13 = vector.shape_cast %12 : vector<64x32xbf16> to vector<4x16x32xbf16>
    %14 = vector.extract_strided_slice %7 {offsets = [0, 64], sizes = [64, 32], strides = [1, 1]} : vector<64x96xf32> to vector<64x32xf32>
    %15 = arith.truncf %14 : vector<64x32xf32> to vector<64x32xbf16>
    %16 = vector.shape_cast %15 : vector<64x32xbf16> to vector<4x16x32xbf16>
    %17 = vector.extract_strided_slice %10 {offsets = [0, 0, 0], sizes = [4, 16, 8], strides = [1, 1, 1]} : vector<4x16x32xbf16> to vector<4x16x8xbf16>
    %18 = vector.extract_strided_slice %13 {offsets = [0, 0, 0], sizes = [4, 16, 8], strides = [1, 1, 1]} : vector<4x16x32xbf16> to vector<4x16x8xbf16>
    "tpu.trace_start"() <{level = 10 : i32, message = "bnd,bmd->bnm"}> : () -> ()
    %cst_6 = arith.constant dense<0.000000e+00> : vector<4x16x16xf32>
    %19 = tpu.matmul %17, %18, %cst_6 {dimension_numbers = #tpu.dot_dimension_numbers<[2], [2], [1], [1], [0, 0, 0, 1, 1, 1], [0], [0]>} : vector<4x16x8xbf16>, vector<4x16x8xbf16>, vector<4x16x16xf32> -> vector<4x16x16xf32>
    "tpu.trace_stop"() : () -> ()
    %20 = vector.extract_strided_slice %10 {offsets = [0, 0, 8], sizes = [4, 16, 8], strides = [1, 1, 1]} : vector<4x16x32xbf16> to vector<4x16x8xbf16>
    %21 = vector.extract_strided_slice %13 {offsets = [0, 0, 8], sizes = [4, 16, 8], strides = [1, 1, 1]} : vector<4x16x32xbf16> to vector<4x16x8xbf16>
    "tpu.trace_start"() <{level = 10 : i32, message = "bnd,bmd->bnm"}> : () -> ()
    %cst_7 = arith.constant dense<0.000000e+00> : vector<4x16x16xf32>
    %22 = tpu.matmul %20, %21, %cst_7 {dimension_numbers = #tpu.dot_dimension_numbers<[2], [2], [1], [1], [0, 0, 0, 1, 1, 1], [0], [0]>} : vector<4x16x8xbf16>, vector<4x16x8xbf16>, vector<4x16x16xf32> -> vector<4x16x16xf32>
    "tpu.trace_stop"() : () -> ()
    %23 = vector.extract_strided_slice %10 {offsets = [0, 0, 16], sizes = [4, 16, 8], strides = [1, 1, 1]} : vector<4x16x32xbf16> to vector<4x16x8xbf16>
    %24 = vector.extract_strided_slice %13 {offsets = [0, 0, 16], sizes = [4, 16, 8], strides = [1, 1, 1]} : vector<4x16x32xbf16> to vector<4x16x8xbf16>
    "tpu.trace_start"() <{level = 10 : i32, message = "bnd,bmd->bnm"}> : () -> ()
    %cst_8 = arith.constant dense<0.000000e+00> : vector<4x16x16xf32>
    %25 = tpu.matmul %23, %24, %cst_8 {dimension_numbers = #tpu.dot_dimension_numbers<[2], [2], [1], [1], [0, 0, 0, 1, 1, 1], [0], [0]>} : vector<4x16x8xbf16>, vector<4x16x8xbf16>, vector<4x16x16xf32> -> vector<4x16x16xf32>
    "tpu.trace_stop"() : () -> ()
    %26 = vector.extract_strided_slice %10 {offsets = [0, 0, 24], sizes = [4, 16, 8], strides = [1, 1, 1]} : vector<4x16x32xbf16> to vector<4x16x8xbf16>
    %27 = vector.extract_strided_slice %13 {offsets = [0, 0, 24], sizes = [4, 16, 8], strides = [1, 1, 1]} : vector<4x16x32xbf16> to vector<4x16x8xbf16>
    "tpu.trace_start"() <{level = 10 : i32, message = "bnd,bmd->bnm"}> : () -> ()
    %cst_9 = arith.constant dense<0.000000e+00> : vector<4x16x16xf32>
    %28 = tpu.matmul %26, %27, %cst_9 {dimension_numbers = #tpu.dot_dimension_numbers<[2], [2], [1], [1], [0, 0, 0, 1, 1, 1], [0], [0]>} : vector<4x16x8xbf16>, vector<4x16x8xbf16>, vector<4x16x16xf32> -> vector<4x16x16xf32>
    "tpu.trace_stop"() : () -> ()
    %29 = tpu.concatenate %19, %22, %25, %28 in 1 : vector<4x16x16xf32>, vector<4x16x16xf32>, vector<4x16x16xf32>, vector<4x16x16xf32> -> vector<4x64x16xf32>
    %c0_10 = arith.constant 0 : index
    %c0_11 = arith.constant 0 : index
    %c0_12 = arith.constant 0 : index
    %30 = vector.load %arg6[%c0_10, %c0_11, %c0_12] : memref<4x64x16xf32, #tpu.memory_space<vmem>>, vector<4x64x16xf32>
    %31 = arith.addf %29, %30 : vector<4x64x16xf32>
    %cst_13 = arith.constant dense<0xFF800000> : vector<4x64xf32>
    %32 = vector.multi_reduction <maximumf>, %31, %cst_13 [2] : vector<4x64x16xf32> to vector<4x64xf32>
    %33 = vector.shape_cast %32 : vector<4x64xf32> to vector<4x64x1xf32>
    %34 = vector.broadcast %33 : vector<4x64x1xf32> to vector<4x64x16xf32>
    %35 = arith.subf %31, %34 : vector<4x64x16xf32>
    %36 = math.exp %35 : vector<4x64x16xf32>
    %cst_14 = arith.constant dense<0.000000e+00> : vector<4x64xf32>
    %37 = vector.multi_reduction <add>, %36, %cst_14 [2] : vector<4x64x16xf32> to vector<4x64xf32>
    %38 = vector.shape_cast %37 : vector<4x64xf32> to vector<4x64x1xf32>
    %39 = tpu.reciprocal %38 {approx = true} : vector<4x64x1xf32> -> vector<4x64x1xf32>
    %40 = vector.broadcast %39 : vector<4x64x1xf32> to vector<4x64x16xf32>
    %41 = arith.mulf %36, %40 : vector<4x64x16xf32>
    %42 = vector.extract_strided_slice %41 {offsets = [0, 0, 0], sizes = [4, 16, 16], strides = [1, 1, 1]} : vector<4x64x16xf32> to vector<4x16x16xf32>
    %43 = arith.truncf %42 : vector<4x16x16xf32> to vector<4x16x16xbf16>
    %44 = vector.extract_strided_slice %16 {offsets = [0, 0, 0], sizes = [4, 16, 8], strides = [1, 1, 1]} : vector<4x16x32xbf16> to vector<4x16x8xbf16>
    "tpu.trace_start"() <{level = 10 : i32, message = "bnm,bmd->bnd"}> : () -> ()
    %cst_15 = arith.constant dense<0.000000e+00> : vector<4x16x8xf32>
    %45 = tpu.matmul %43, %44, %cst_15 {dimension_numbers = #tpu.dot_dimension_numbers<[2], [1], [1], [2], [0, 0, 0, 1, 1, 2], [0], [0]>} : vector<4x16x16xbf16>, vector<4x16x8xbf16>, vector<4x16x8xf32> -> vector<4x16x8xf32>
    "tpu.trace_stop"() : () -> ()
    %46 = vector.extract_strided_slice %41 {offsets = [0, 16, 0], sizes = [4, 16, 16], strides = [1, 1, 1]} : vector<4x64x16xf32> to vector<4x16x16xf32>
    %47 = arith.truncf %46 : vector<4x16x16xf32> to vector<4x16x16xbf16>
    %48 = vector.extract_strided_slice %16 {offsets = [0, 0, 8], sizes = [4, 16, 8], strides = [1, 1, 1]} : vector<4x16x32xbf16> to vector<4x16x8xbf16>
    "tpu.trace_start"() <{level = 10 : i32, message = "bnm,bmd->bnd"}> : () -> ()
    %cst_16 = arith.constant dense<0.000000e+00> : vector<4x16x8xf32>
    %49 = tpu.matmul %47, %48, %cst_16 {dimension_numbers = #tpu.dot_dimension_numbers<[2], [1], [1], [2], [0, 0, 0, 1, 1, 2], [0], [0]>} : vector<4x16x16xbf16>, vector<4x16x8xbf16>, vector<4x16x8xf32> -> vector<4x16x8xf32>
    "tpu.trace_stop"() : () -> ()
    %50 = vector.extract_strided_slice %41 {offsets = [0, 32, 0], sizes = [4, 16, 16], strides = [1, 1, 1]} : vector<4x64x16xf32> to vector<4x16x16xf32>
    %51 = arith.truncf %50 : vector<4x16x16xf32> to vector<4x16x16xbf16>
    %52 = vector.extract_strided_slice %16 {offsets = [0, 0, 16], sizes = [4, 16, 8], strides = [1, 1, 1]} : vector<4x16x32xbf16> to vector<4x16x8xbf16>
    "tpu.trace_start"() <{level = 10 : i32, message = "bnm,bmd->bnd"}> : () -> ()
    %cst_17 = arith.constant dense<0.000000e+00> : vector<4x16x8xf32>
    %53 = tpu.matmul %51, %52, %cst_17 {dimension_numbers = #tpu.dot_dimension_numbers<[2], [1], [1], [2], [0, 0, 0, 1, 1, 2], [0], [0]>} : vector<4x16x16xbf16>, vector<4x16x8xbf16>, vector<4x16x8xf32> -> vector<4x16x8xf32>
    "tpu.trace_stop"() : () -> ()
    %54 = vector.extract_strided_slice %41 {offsets = [0, 48, 0], sizes = [4, 16, 16], strides = [1, 1, 1]} : vector<4x64x16xf32> to vector<4x16x16xf32>
    %55 = arith.truncf %54 : vector<4x16x16xf32> to vector<4x16x16xbf16>
    %56 = vector.extract_strided_slice %16 {offsets = [0, 0, 24], sizes = [4, 16, 8], strides = [1, 1, 1]} : vector<4x16x32xbf16> to vector<4x16x8xbf16>
    "tpu.trace_start"() <{level = 10 : i32, message = "bnm,bmd->bnd"}> : () -> ()
    %cst_18 = arith.constant dense<0.000000e+00> : vector<4x16x8xf32>
    %57 = tpu.matmul %55, %56, %cst_18 {dimension_numbers = #tpu.dot_dimension_numbers<[2], [1], [1], [2], [0, 0, 0, 1, 1, 2], [0], [0]>} : vector<4x16x16xbf16>, vector<4x16x8xbf16>, vector<4x16x8xf32> -> vector<4x16x8xf32>
    "tpu.trace_stop"() : () -> ()
    %58 = tpu.concatenate %45, %49, %53, %57 in 2 : vector<4x16x8xf32>, vector<4x16x8xf32>, vector<4x16x8xf32>, vector<4x16x8xf32> -> vector<4x16x32xf32>
    %59 = vector.shape_cast %58 : vector<4x16x32xf32> to vector<64x32xf32>
    %60 = arith.truncf %59 : vector<64x32xf32> to vector<64x32xbf16>
    %c0_19 = arith.constant 0 : index
    %c0_20 = arith.constant 0 : index
    %61 = vector.load %arg4[%c0_19, %c0_20] : memref<32x32xbf16, #tpu.memory_space<vmem>>, vector<32x32xbf16>
    %cst_21 = arith.constant dense<0.000000e+00> : vector<64x32xf32>
    %62 = tpu.matmul %60, %61, %cst_21 {dimension_numbers = #tpu.dot_dimension_numbers<[1], [0], [0], [1], [0, 0, 1, 1], [], []>} : vector<64x32xbf16>, vector<32x32xbf16>, vector<64x32xf32> -> vector<64x32xf32>
    %c0_22 = arith.constant 0 : index
    %c0_23 = arith.constant 0 : index
    %63 = vector.load %arg5[%c0_22, %c0_23] : memref<1x32xf32, #tpu.memory_space<vmem>>, vector<1x32xf32>
    %64 = vector.broadcast %63 : vector<1x32xf32> to vector<64x32xf32>
    %65 = arith.addf %62, %64 : vector<64x32xf32>
    %66 = vector.shape_cast %65 : vector<64x32xf32> to vector<4x16x32xf32>
    %c0_24 = arith.constant 0 : index
    %c0_25 = arith.constant 0 : index
    %c0_26 = arith.constant 0 : index
    %67 = vector.load %arg7[%c0_24, %c0_25, %c0_26] : memref<4x16x32xf32, #tpu.memory_space<vmem>>, vector<4x16x32xf32>
    tpu.vector_store %arg7[%c0_24, %c0_25, %c0_26], %66 {strides = array<i32>} : memref<4x16x32xf32, #tpu.memory_space<vmem>>, vector<4x16x32xf32>,
    return
  }
  func.func @transform_0(%arg0: i32) -> (i32, i32, i32) {
    %c0_i32 = arith.constant 0 : i32
    %c0_i32_0 = arith.constant 0 : i32
    %c0_i32_1 = arith.constant 0 : i32
    return %arg0, %c0_i32, %c0_i32_0 : i32, i32, i32
  }
  func.func @transform_1(%arg0: i32) -> (i32, i32) {
    %c0_i32 = arith.constant 0 : i32
    %c0_i32_0 = arith.constant 0 : i32
    %c0_i32_1 = arith.constant 0 : i32
    return %c0_i32, %c0_i32_0 : i32, i32
  }
  func.func @transform_2(%arg0: i32) -> (i32, i32) {
    %c0_i32 = arith.constant 0 : i32
    %c0_i32_0 = arith.constant 0 : i32
    %c0_i32_1 = arith.constant 0 : i32
    return %c0_i32, %c0_i32_0 : i32, i32
  }
  func.func @transform_3(%arg0: i32) -> (i32, i32) {
    %c0_i32 = arith.constant 0 : i32
    %c0_i32_0 = arith.constant 0 : i32
    %c0_i32_1 = arith.constant 0 : i32
    return %c0_i32, %c0_i32_0 : i32, i32
  }
  func.func @transform_4(%arg0: i32) -> (i32, i32) {
    %c0_i32 = arith.constant 0 : i32
    %c0_i32_0 = arith.constant 0 : i32
    %c0_i32_1 = arith.constant 0 : i32
    return %c0_i32, %c0_i32_0 : i32, i32
  }
  func.func @transform_5(%arg0: i32) -> (i32, i32, i32) {
    %c0_i32 = arith.constant 0 : i32
    %c0_i32_0 = arith.constant 0 : i32
    %c0_i32_1 = arith.constant 0 : i32
    return %arg0, %c0_i32, %c0_i32_0 : i32, i32, i32
  }
  func.func @transform_6(%arg0: i32) -> (i32, i32, i32) {
    %c0_i32 = arith.constant 0 : i32
    %c0_i32_0 = arith.constant 0 : i32
    %c0_i32_1 = arith.constant 0 : i32
    return %arg0, %c0_i32, %c0_i32_0 : i32, i32, i32
  }
}

</mosaic_0001>

<llo_original>
// kernel: tpu_custom_call.1
$region0: #{tpu_custom_call.1}
  #allocation0 [shape = 'u32[]', space=smem, size = 0x4, offset = 0x4, fixed_abs, tag = 'smem constant byte address 0x4 - core index']
  #allocation1 [shape = 'u32[144,128]{1,0:T(1,128)}', space=vmem, size = 0x12000, scoped, tag = 'internal scratch']
  %s0 = inlined_call_operand.vmem [shape: f32[8,16,32], index: 0, kind: input, shape index: {}]
  %s1 = inlined_call_operand.vmem [shape: bf16[32,96], index: 1, kind: input, shape index: {}]
  %s2 = inlined_call_operand.vmem [shape: f32[1,96], index: 2, kind: input, shape index: {}]
  %s3 = inlined_call_operand.vmem [shape: bf16[32,32], index: 3, kind: input, shape index: {}]
  %s4 = inlined_call_operand.vmem [shape: f32[1,32], index: 4, kind: input, shape index: {}]
  %s5 = inlined_call_operand.vmem [shape: f32[8,64,16], index: 5, kind: input, shape index: {}]
  %s6 = inlined_call_operand.hbm [shape: f32[8,16,32], index: 6, kind: output, shape index: {}]
  %s7 = sld [smem:[#allocation0]]
  $region57: #{tpu_custom_call.1} parent=0
    _
  %s9 = ssub.s32 1, %s7
  %s10 = scalar_select 0, %s9, %s7
  $region1: #{tpu_custom_call.1} parent=0
    #allocation2 [shape = 'u8[65536]{0}', space=vmem, size = 0x10000, scoped, tag = 'output window, operand 0']
    #allocation3 [shape = 's32[2]{0}', space=sflag, size = 0x8, scoped, tag = 'scoped memory for tpu_custom_call.1']
    %11 = vsyncpa [#allocation3], 0
    %s12 = scalar_lea.sflag [#allocation3], 1
    %13 = vsyncpa %s12, 0
    loop: start=0, step=1, limit=4
    $region2: #{tpu_custom_call.1} parent=1 // loop_pre_header
      _
    $region3: #{tpu_custom_call.1} parent=1 // loop_header
      %s15 = sphi 0, %s19
      %p16 = scmp.ge.s32.totalorder %s15, 4
      %s25 = sphi 0, %s27
      %s28 = sphi 0, %s25
      %s29 = sphi 0, %s28
      %s45 = sphi 0, %s29
      %s49 = sphi 0, %s49
      %s51 = sphi 0, %s49
      %s52 = sphi 0, %s51
      %s66 = sphi 0, %s52
      %s70 = sphi 0, %s70
      %s72 = sphi 0, %s70
      %s73 = sphi 0, %s72
      %s87 = sphi 0, %s73
      %s91 = sphi 0, %s91
      %s93 = sphi 0, %s91
      %s94 = sphi 0, %s93
      %s108 = sphi 0, %s94
      %s112 = sphi 0, %s112
      %s114 = sphi 0, %s112
      %s115 = sphi 0, %s114
      %s129 = sphi 0, %s115
      %s135 = sphi 0, %s137
      %s138 = sphi 0, %s135
      %s139 = sphi 0, %s138
      %s155 = sphi 0, %s139
      %s161 = sphi 0, %s163
      %s164 = sphi 0, %s161
      %s165 = sphi 0, %s164
      %s181 = sphi 0, %s165
    $region4: #{tpu_custom_call.1} parent=1 // loop_header_branch
      %18 = sbr.rel (%p16) target = $region8
    $region5: #{tpu_custom_call.1} parent=1 // loop_body
      %s20 = ssub.s32 %s15, 1
      %s21 = ssub.s32 %s15, 2
      %s22 = sadd.s32 %s15, 1
      %s23 = ssub.s32 %s15, %s22
      %p24 = scmp.eq.s32.totalorder %s23, 0
      %s26 = sadd.s32 %s25, 1
      %s27 = scalar_select %p24, %s25, %s26
      %p30 = pneg %p24
      %p31 = scmp.eq.s32.totalorder %s15, 1
      %p32 = por %p30, %p31
      %p33 = scmp.ne.s32.totalorder %s25, %s28
      %p34 = scmp.eq.s32.totalorder %s15, 0
      %p35 = por %p33, %p34
      %p36 = scmp.ne.s32.totalorder %s25, %s28
      %p37 = scmp.eq.s32.totalorder %s20, 1
      %p38 = por %p36, %p37
      %p39 = scmp.ne.s32.totalorder %s28, %s29
      %p40 = scmp.eq.s32.totalorder %s20, 0
      %p41 = por %p39, %p40
      %p42 = scmp.ne.s32.totalorder %s28, %s29
      %p43 = scmp.eq.s32.totalorder %s21, 1
      %p44 = por %p42, %p43
      %p46 = scmp.ne.s32.totalorder %s29, %s45
      %p47 = scmp.eq.s32.totalorder %s21, 0
      %p48 = por %p46, %p47
      %s50 = sadd.s32 %s49, 1
      %p53 = scmp.eq.s32.totalorder %s15, 1
      %p54 = scmp.ne.s32.totalorder %s49, %s51
      %p55 = scmp.eq.s32.totalorder %s15, 0
      %p56 = por %p54, %p55
      %p57 = scmp.ne.s32.totalorder %s49, %s51
      %p58 = scmp.eq.s32.totalorder %s20, 1
      %p59 = por %p57, %p58
      %p60 = scmp.ne.s32.totalorder %s51, %s52
      %p61 = scmp.eq.s32.totalorder %s20, 0
      %p62 = por %p60, %p61
      %p63 = scmp.ne.s32.totalorder %s51, %s52
      %p64 = scmp.eq.s32.totalorder %s21, 1
      %p65 = por %p63, %p64
      %p67 = scmp.ne.s32.totalorder %s52, %s66
      %p68 = scmp.eq.s32.totalorder %s21, 0
      %p69 = por %p67, %p68
      %s71 = sadd.s32 %s70, 1
      %p74 = scmp.eq.s32.totalorder %s15, 1
      %p75 = scmp.ne.s32.totalorder %s70, %s72
      %p76 = scmp.eq.s32.totalorder %s15, 0
      %p77 = por %p75, %p76
      %p78 = scmp.ne.s32.totalorder %s70, %s72
      %p79 = scmp.eq.s32.totalorder %s20, 1
      %p80 = por %p78, %p79
      %p81 = scmp.ne.s32.totalorder %s72, %s73
      %p82 = scmp.eq.s32.totalorder %s20, 0
      %p83 = por %p81, %p82
      %p84 = scmp.ne.s32.totalorder %s72, %s73
      %p85 = scmp.eq.s32.totalorder %s21, 1
      %p86 = por %p84, %p85
      %p88 = scmp.ne.s32.totalorder %s73, %s87
      %p89 = scmp.eq.s32.totalorder %s21, 0
      %p90 = por %p88, %p89
      %s92 = sadd.s32 %s91, 1
      %p95 = scmp.eq.s32.totalorder %s15, 1
      %p96 = scmp.ne.s32.totalorder %s91, %s93
      %p97 = scmp.eq.s32.totalorder %s15, 0
      %p98 = por %p96, %p97
      %p99 = scmp.ne.s32.totalorder %s91, %s93
      %p100 = scmp.eq.s32.totalorder %s20, 1
      %p101 = por %p99, %p100
      %p102 = scmp.ne.s32.totalorder %s93, %s94
      %p103 = scmp.eq.s32.totalorder %s20, 0
      %p104 = por %p102, %p103
      %p105 = scmp.ne.s32.totalorder %s93, %s94
      %p106 = scmp.eq.s32.totalorder %s21, 1
      %p107 = por %p105, %p106
      %p109 = scmp.ne.s32.totalorder %s94, %s108
      %p110 = scmp.eq.s32.totalorder %s21, 0
      %p111 = por %p109, %p110
      %s113 = sadd.s32 %s112, 1
      %p116 = scmp.eq.s32.totalorder %s15, 1
      %p117 = scmp.ne.s32.totalorder %s112, %s114
      %p118 = scmp.eq.s32.totalorder %s15, 0
      %p119 = por %p117, %p118
      %p120 = scmp.ne.s32.totalorder %s112, %s114
      %p121 = scmp.eq.s32.totalorder %s20, 1
      %p122 = por %p120, %p121
      %p123 = scmp.ne.s32.totalorder %s114, %s115
      %p124 = scmp.eq.s32.totalorder %s20, 0
      %p125 = por %p123, %p124
      %p126 = scmp.ne.s32.totalorder %s114, %s115
      %p127 = scmp.eq.s32.totalorder %s21, 1
      %p128 = por %p126, %p127
      %p130 = scmp.ne.s32.totalorder %s115, %s129
      %p131 = scmp.eq.s32.totalorder %s21, 0
      %p132 = por %p130, %p131
      %s133 = ssub.s32 %s15, %s22
      %p134 = scmp.eq.s32.totalorder %s133, 0
      %s136 = sadd.s32 %s135, 1
      %s137 = scalar_select %p134, %s135, %s136
      %p140 = pneg %p134
      %p141 = scmp.eq.s32.totalorder %s15, 1
      %p142 = por %p140, %p141
      %p143 = scmp.ne.s32.totalorder %s135, %s138
      %p144 = scmp.eq.s32.totalorder %s15, 0
      %p145 = por %p143, %p144
      %p146 = scmp.ne.s32.totalorder %s135, %s138
      %p147 = scmp.eq.s32.totalorder %s20, 1
      %p148 = por %p146, %p147
      %p149 = scmp.ne.s32.totalorder %s138, %s139
      %p150 = scmp.eq.s32.totalorder %s20, 0
      %p151 = por %p149, %p150
      %p152 = scmp.ne.s32.totalorder %s138, %s139
      %p153 = scmp.eq.s32.totalorder %s21, 1
      %p154 = por %p152, %p153
      %p156 = scmp.ne.s32.totalorder %s139, %s155
      %p157 = scmp.eq.s32.totalorder %s21, 0
      %p158 = por %p156, %p157
      %s159 = ssub.s32 %s15, %s22
      %p160 = scmp.eq.s32.totalorder %s159, 0
      %s162 = sadd.s32 %s161, 1
      %s163 = scalar_select %p160, %s161, %s162
      %p166 = pneg %p160
      %p167 = scmp.eq.s32.totalorder %s15, 1
      %p168 = por %p166, %p167
      %p169 = scmp.ne.s32.totalorder %s161, %s164
      %p170 = scmp.eq.s32.totalorder %s15, 0
      %p171 = por %p169, %p170
      %p172 = scmp.ne.s32.totalorder %s161, %s164
      %p173 = scmp.eq.s32.totalorder %s20, 1
      %p174 = por %p172, %p173
      %p175 = scmp.ne.s32.totalorder %s164, %s165
      %p176 = scmp.eq.s32.totalorder %s20, 0
      %p177 = por %p175, %p176
      %p178 = scmp.ne.s32.totalorder %s164, %s165
      %p179 = scmp.eq.s32.totalorder %s21, 1
      %p180 = por %p178, %p179
      %p182 = scmp.ne.s32.totalorder %s165, %s181
      %p183 = scmp.eq.s32.totalorder %s21, 0
      %p184 = por %p182, %p183
      %p185 = scmp.le.s32.totalorder 1, %s15
      %p186 = scmp.lt.s32.totalorder %s15, 3
      %p187 = pnand %p185, %p186
      %p188 = pneg %p187
      // Predicated region
      $region9: #{tpu_custom_call.1} parent=5 // pred_check
        _
      $region10: #{tpu_custom_call.1} parent=5 // pred_check_branch
        %190 = sbr.rel (%p187) target = $region12
      $region11: #{tpu_custom_call.1} parent=5 // pred_region
        %s191 = ssub.s32 %s15, 1
        // Predicated region
        $region13: #{tpu_custom_call.1} parent=11 // pred_check
          %p192 = pneg %p62
        $region14: #{tpu_custom_call.1} parent=11 // pred_check_branch
          %194 = sbr.rel (%p192) target = $region16
        $region15: #{tpu_custom_call.1} parent=11 // pred_region
          _
        $region16: #{tpu_custom_call.1} parent=11 // pred_fallthru
          _
        // Predicated region
        $region17: #{tpu_custom_call.1} parent=11 // pred_check
          %p195 = pneg %p83
        $region18: #{tpu_custom_call.1} parent=11 // pred_check_branch
          %197 = sbr.rel (%p195) target = $region20
        $region19: #{tpu_custom_call.1} parent=11 // pred_region
          _
        $region20: #{tpu_custom_call.1} parent=11 // pred_fallthru
          _
        // Predicated region
        $region21: #{tpu_custom_call.1} parent=11 // pred_check
          %p198 = pneg %p104
        $region22: #{tpu_custom_call.1} parent=11 // pred_check_branch
          %200 = sbr.rel (%p198) target = $region24
        $region23: #{tpu_custom_call.1} parent=11 // pred_region
          _
        $region24: #{tpu_custom_call.1} parent=11 // pred_fallthru
          _
        // Predicated region
        $region25: #{tpu_custom_call.1} parent=11 // pred_check
          %p201 = pneg %p125
        $region26: #{tpu_custom_call.1} parent=11 // pred_check_branch
          %203 = sbr.rel (%p201) target = $region28
        $region27: #{tpu_custom_call.1} parent=11 // pred_region
          _
        $region28: #{tpu_custom_call.1} parent=11 // pred_fallthru
          _
      $region12: #{tpu_custom_call.1} parent=5 // pred_fallthru
        _
      %p204 = scmp.lt.s32.totalorder %s15, 2
      // Predicated region
      $region29: #{tpu_custom_call.1} parent=5 // pred_check
        %p205 = pneg %p204
      $region30: #{tpu_custom_call.1} parent=5 // pred_check_branch
        %207 = sbr.rel (%p205) target = $region32
      $region31: #{tpu_custom_call.1} parent=5 // pred_region
        // Predicated region
        $region33: #{tpu_custom_call.1} parent=31 // pred_check
          %p208 = pneg %p35
        $region34: #{tpu_custom_call.1} parent=31 // pred_check_branch
          %210 = sbr.rel (%p208) target = $region36
        $region35: #{tpu_custom_call.1} parent=31 // pred_region
          %s211 = smul.u32 4, %s15
          %p212 = scmp.lt.s32.totalorder %s211, 7
          %s213 = scalar_select %p212, %s211, 7
          %s214 = smul.addr %s213, 2
          %s215 = smul.addr %s214, 8
          %s216 = scalar_lea.vmem %s0, %s215
          %s217 = smul.u32 4, %s15
        $region36: #{tpu_custom_call.1} parent=31 // pred_fallthru
          _
        // Predicated region
        $region37: #{tpu_custom_call.1} parent=31 // pred_check
          %p218 = pneg %p145
        $region38: #{tpu_custom_call.1} parent=31 // pred_check_branch
          %220 = sbr.rel (%p218) target = $region40
        $region39: #{tpu_custom_call.1} parent=31 // pred_region
          %s221 = smul.u32 4, %s15
          %p222 = scmp.lt.s32.totalorder %s221, 7
          %s223 = scalar_select %p222, %s221, 7
          %s224 = smul.addr %s223, 8
          %s225 = smul.addr %s224, 8
          %s226 = scalar_lea.vmem %s5, %s225
          %s227 = smul.u32 4, %s15
        $region40: #{tpu_custom_call.1} parent=31 // pred_fallthru
          _
      $region32: #{tpu_custom_call.1} parent=5 // pred_fallthru
        _
      %p228 = scmp.le.s32.totalorder 1, %s15
      %p229 = scmp.lt.s32.totalorder %s15, 3
      %p230 = pnand %p228, %p229
      %p231 = pneg %p230
      // Predicated region
      $region41: #{tpu_custom_call.1} parent=5 // pred_check
        _
      $region42: #{tpu_custom_call.1} parent=5 // pred_check_branch
        %233 = sbr.rel (%p230) target = $region44
      $region43: #{tpu_custom_call.1} parent=5 // pred_region
        %s234 = ssub.s32 %s15, 1
        %s235 = smul.u32 4, %s20
        %p236 = scmp.lt.s32.totalorder %s235, 7
        %s237 = scalar_select %p236, %s235, 7
        %s238 = smul.addr %s237, 2
        %s239 = smul.addr %s238, 8
        %s240 = scalar_lea.vmem %s0, %s239
        %p241 = pneg %p41
        %p242 = pneg %p38
        %p243 = pneg %p62
        %p244 = pneg %p59
        %p245 = pneg %p83
        %p246 = pneg %p80
        %p247 = pneg %p104
        %p248 = pneg %p101
        %p249 = pneg %p125
        %p250 = pneg %p122
        %s251 = smul.u32 4, %s20
        %p252 = scmp.lt.s32.totalorder %s251, 7
        %s253 = scalar_select %p252, %s251, 7
        %s254 = smul.addr %s253, 8
        %s255 = smul.addr %s254, 8
        %s256 = scalar_lea.vmem %s5, %s255
        %p257 = pneg %p151
        %p258 = pneg %p148
        %p259 = pneg %p177
        %p260 = pneg %p174
        %s261 = sand.u32 %s164, 1
        %s262 = scalar_lea.sflag [#allocation3], %s261
        %s263 = sand.u32 %s164, 1
        %s264 = smul.addr %s263, 64
        %s265 = scalar_lea.vmem [#allocation2], %s264
        %s266 = smul.u32 4, %s20
        %p267 = scmp.lt.s32.totalorder %s266, 7
        %s268 = scalar_select %p267, %s266, 7
        %s269 = smul.addr %s268, 2
        %s270 = smul.addr %s269, 8
        %s271 = scalar_lea.vmem %s0, %s270
        %s272 = smul.u32 4, %s20
        %s273 = smul.u32 4, %s20
        %p274 = scmp.lt.s32.totalorder %s273, 7
        %s275 = scalar_select %p274, %s273, 7
        %s276 = smul.addr %s275, 8
        %s277 = smul.addr %s276, 8
        %s278 = scalar_lea.vmem %s5, %s277
        %s279 = smul.u32 4, %s20
        %s280 = smul.u32 4, %s20
        %v282 = vld [vmem:[%s271] sm:$0xff]
        %v283 = vld [vmem:[%s271 + $0x8] sm:$0xff]
        %v284 = vld [vmem:[%s271 + $0x10] sm:$0xff]
        %v285 = vld [vmem:[%s271 + $0x18] sm:$0xff]
        %v286 = vld [vmem:[%s271 + $0x20] sm:$0xff]
        %v287 = vld [vmem:[%s271 + $0x28] sm:$0xff]
        %v288 = vld [vmem:[%s271 + $0x30] sm:$0xff]
        %v289 = vld [vmem:[%s271 + $0x38] sm:$0xff]
        %v290 = vpack.c.bf16 %v283, %v282
        %v291 = vpack.c.bf16 %v285, %v284
        %v292 = vpack.c.bf16 %v287, %v286
        %v293 = vpack.c.bf16 %v289, %v288
        %v294 = vld [vmem:[%s1] sm:$0xf]
        %v295 = vld [vmem:[%s1 + $0x4] sm:$0xf]
        %v296 = vld [vmem:[%s1 + $0x8] sm:$0xf]
        %v297 = vld [vmem:[%s1 + $0xc] sm:$0xf]
        %v298 = vld [vmem:[%s2] sm:$0x1]
        %v300 = vlaneseq
        %v301 = vshrl.u32 %v300, 7
        %v302 = vsub.s32 0, %v301
        %v303 = vrot.slane %v298, %v302
        %v309 = vunpack.c.l.b16 %v294
        %v310 = vunpack.c.l.b16 %v295
        %v311 = vunpack.c.l.b16 %v296
        %v312 = vunpack.c.l.b16 %v297
        %v313 = vpack.c.b16 %v310, %v309
        %v314 = vpack.c.b16 %v312, %v311
        %vm317 = vcmask 261120
        %v319 = vsel %vm317, %v290, 0
        %v322 = vsel %vm317, %v291, 0
        %v325 = vsel %vm317, %v292, 0
        %v328 = vsel %vm317, %v293, 0
        %330 = vmatprep.subr.bf16.mxu0 0
        %331 = vmatpush1.bf16.msra.mxu0 %v313
        %332 = vmatprep.subr.bf16.mxu0 0
        %333 = vmatpush1.bf16.msra.mxu0 %v314
        %334 = vmatprep.subr.bf16.mxu0 0
        %335 = vmatpush1.bf16.msra.mxu0 0
        %336 = vmatprep.subr.bf16.mxu0 0
        %337 = vmatpush1.bf16.msra.mxu0 0
        %338 = vmatprep.subr.bf16.mxu0 0
        %339 = vmatpush1.bf16.msra.mxu0 0
        %340 = vmatprep.subr.bf16.mxu0 0
        %341 = vmatpush1.bf16.msra.mxu0 0
        %342 = vmatprep.subr.bf16.mxu0 0
        %343 = vmatpush1.bf16.msra.mxu0 0
        %344 = vmatprep.subr.bf16.mxu0 0
        %345 = vmatpush1.bf16.msra.mxu0 0
        %346 = vmatprep.subr.bf16.mxu0 0
        %347 = vmatpush1.bf16.msra.mxu0 0
        %348 = vmatprep.subr.bf16.mxu0 0
        %349 = vmatpush1.bf16.msra.mxu0 0
        %350 = vmatprep.subr.bf16.mxu0 0
        %351 = vmatpush1.bf16.msra.mxu0 0
        %352 = vmatprep.subr.bf16.mxu0 0
        %353 = vmatpush1.bf16.msra.mxu0 0
        %354 = vmatprep.subr.bf16.mxu0 0
        %355 = vmatpush1.bf16.msra.mxu0 0
        %356 = vmatprep.subr.bf16.mxu0 0
        %357 = vmatpush1.bf16.msra.mxu0 0
        %358 = vmatprep.subr.bf16.mxu0 0
        %359 = vmatpush1.bf16.msra.mxu0 0
        %360 = vmatprep.subr.bf16.mxu0 0
        %361 = vmatpush1.bf16.msra.mxu0 0
        %362 = vmatprep.mubr.bf16.mxu0 0
        %363 = vmatmul.mubr.bf16.gmra.mrb[0].mxu0 %v319
        %v364 = vpop.f32.mrb[0].mxu0
        %v365 = vadd.f32 %v303, %v364
        %v366 = vpop.f32.mrb[0].mxu0
        %v367 = vpop.f32.mrb[0].mxu0
        %v368 = vadd.f32 %v303, %v367
        %v369 = vpop.f32.mrb[0].mxu0
        %370 = vmatprep.mubr.bf16.mxu0 0
        %371 = vmatmul.mubr.bf16.gmra.mrb[0].mxu0 %v322
        %v372 = vpop.f32.mrb[0].mxu0
        %v373 = vadd.f32 %v303, %v372
        %v374 = vpop.f32.mrb[0].mxu0
        %v375 = vpop.f32.mrb[0].mxu0
        %v376 = vadd.f32 %v303, %v375
        %v377 = vpop.f32.mrb[0].mxu0
        %378 = vmatprep.mubr.bf16.mxu0 0
        %379 = vmatmul.mubr.bf16.gmra.mrb[0].mxu0 %v325
        %v380 = vpop.f32.mrb[0].mxu0
        %v381 = vadd.f32 %v303, %v380
        %v382 = vpop.f32.mrb[0].mxu0
        %v383 = vpop.f32.mrb[0].mxu0
        %v384 = vadd.f32 %v303, %v383
        %v385 = vpop.f32.mrb[0].mxu0
        %386 = vmatprep.mubr.bf16.mxu0 0
        %387 = vmatmul.mubr.bf16.gmra.mrb[0].mxu0 %v328
        %v388 = vpop.f32.mrb[0].mxu0
        %v389 = vadd.f32 %v303, %v388
        %v390 = vpop.f32.mrb[0].mxu0
        %v391 = vpop.f32.mrb[0].mxu0
        %v392 = vadd.f32 %v303, %v391
        %v393 = vpop.f32.mrb[0].mxu0
        %394 = vdwg.mxu0
        %v395 = vpack.c.bf16 %v368, %v365
        %v396 = vpack.c.bf16 %v376, %v373
        %v397 = vpack.c.bf16 %v384, %v381
        %v398 = vpack.c.bf16 %v392, %v389
        %400 = vrot.lane.b32.xlu0 %v395, 96
        %v401 = vpop.permute.xlu0 %400
        %vm402 = vcmask 64512
        %v404 = vsel %vm402, %v395, 0
        %v407 = vsel %vm402, %v401, 0
        %409 = vmatprep.subr.bf16.mxu0 0
        %410 = vmatpush1.bf16.xpose.msra.mxu0 %v407
        %411 = vmatprep.subr.bf16.mxu0 0
        %412 = vmatpush1.bf16.xpose.msra.mxu0 0
        %413 = vmatprep.subr.bf16.mxu0 0
        %414 = vmatpush1.bf16.xpose.msra.mxu0 0
        %415 = vmatprep.subr.bf16.mxu0 0
        %416 = vmatpush1.bf16.xpose.msra.mxu0 0
        %417 = vmatprep.subr.bf16.mxu0 0
        %418 = vmatpush1.bf16.xpose.msra.mxu0 0
        %419 = vmatprep.subr.bf16.mxu0 0
        %420 = vmatpush1.bf16.xpose.msra.mxu0 0
        %421 = vmatprep.subr.bf16.mxu0 0
        %422 = vmatpush1.bf16.xpose.msra.mxu0 0
        %423 = vmatprep.subr.bf16.mxu0 0
        %424 = vmatpush1.bf16.xpose.msra.mxu0 0
        %425 = vmatprep.subr.bf16.mxu0 0
        %426 = vmatpush1.bf16.xpose.msra.mxu0 0
        %427 = vmatprep.subr.bf16.mxu0 0
        %428 = vmatpush1.bf16.xpose.msra.mxu0 0
        %429 = vmatprep.subr.bf16.mxu0 0
        %430 = vmatpush1.bf16.xpose.msra.mxu0 0
        %431 = vmatprep.subr.bf16.mxu0 0
        %432 = vmatpush1.bf16.xpose.msra.mxu0 0
        %433 = vmatprep.subr.bf16.mxu0 0
        %434 = vmatpush1.bf16.xpose.msra.mxu0 0
        %435 = vmatprep.subr.bf16.mxu0 0
        %436 = vmatpush1.bf16.xpose.msra.mxu0 0
        %437 = vmatprep.subr.bf16.mxu0 0
        %438 = vmatpush1.bf16.xpose.msra.mxu0 0
        %439 = vmatprep.subr.bf16.mxu0 0
        %440 = vmatpush1.bf16.xpose.msra.mxu0 0
        %441 = vmatprep.mubr.bf16.mxu0 0
        %442 = vmatmul.mubr.bf16.gmra.mrb[0].mxu0 %v404
        %v443 = vpop.f32.mrb[0].mxu0
        %v444 = vadd.f32 0.0, %v443
        %v445 = vpop.f32.mrb[0].mxu0
        %v446 = vpop.f32.mrb[0].mxu0
        %v447 = vadd.f32 0.0, %v446
        %v448 = vpop.f32.mrb[0].mxu0
        %449 = vdwg.mxu0
        %451 = vrot.lane.b32.xlu0 %v396, 96
        %v452 = vpop.permute.xlu0 %451
        %v454 = vsel %vm402, %v396, 0
        %v457 = vsel %vm402, %v452, 0
        %459 = vmatprep.subr.bf16.mxu0 0
        %460 = vmatpush1.bf16.xpose.msra.mxu0 %v457
        %461 = vmatprep.subr.bf16.mxu0 0
        %462 = vmatpush1.bf16.xpose.msra.mxu0 0
        %463 = vmatprep.subr.bf16.mxu0 0
        %464 = vmatpush1.bf16.xpose.msra.mxu0 0
        %465 = vmatprep.subr.bf16.mxu0 0
        %466 = vmatpush1.bf16.xpose.msra.mxu0 0
        %467 = vmatprep.subr.bf16.mxu0 0
        %468 = vmatpush1.bf16.xpose.msra.mxu0 0
        %469 = vmatprep.subr.bf16.mxu0 0
        %470 = vmatpush1.bf16.xpose.msra.mxu0 0
        %471 = vmatprep.subr.bf16.mxu0 0
        %472 = vmatpush1.bf16.xpose.msra.mxu0 0
        %473 = vmatprep.subr.bf16.mxu0 0
        %474 = vmatpush1.bf16.xpose.msra.mxu0 0
        %475 = vmatprep.subr.bf16.mxu0 0
        %476 = vmatpush1.bf16.xpose.msra.mxu0 0
        %477 = vmatprep.subr.bf16.mxu0 0
        %478 = vmatpush1.bf16.xpose.msra.mxu0 0
        %479 = vmatprep.subr.bf16.mxu0 0
        %480 = vmatpush1.bf16.xpose.msra.mxu0 0
        %481 = vmatprep.subr.bf16.mxu0 0
        %482 = vmatpush1.bf16.xpose.msra.mxu0 0
        %483 = vmatprep.subr.bf16.mxu0 0
        %484 = vmatpush1.bf16.xpose.msra.mxu0 0
        %485 = vmatprep.subr.bf16.mxu0 0
        %486 = vmatpush1.bf16.xpose.msra.mxu0 0
        %487 = vmatprep.subr.bf16.mxu0 0
        %488 = vmatpush1.bf16.xpose.msra.mxu0 0
        %489 = vmatprep.subr.bf16.mxu0 0
        %490 = vmatpush1.bf16.xpose.msra.mxu0 0
        %491 = vmatprep.mubr.bf16.mxu0 0
        %492 = vmatmul.mubr.bf16.gmra.mrb[0].mxu0 %v454
        %v493 = vpop.f32.mrb[0].mxu0
        %v494 = vadd.f32 0.0, %v493
        %v495 = vpop.f32.mrb[0].mxu0
        %v496 = vpop.f32.mrb[0].mxu0
        %v497 = vadd.f32 0.0, %v496
        %v498 = vpop.f32.mrb[0].mxu0
        %499 = vdwg.mxu0
        %501 = vrot.lane.b32.xlu0 %v397, 96
        %v502 = vpop.permute.xlu0 %501
        %v504 = vsel %vm402, %v397, 0
        %v507 = vsel %vm402, %v502, 0
        %509 = vmatprep.subr.bf16.mxu0 0
        %510 = vmatpush1.bf16.xpose.msra.mxu0 %v507
        %511 = vmatprep.subr.bf16.mxu0 0
        %512 = vmatpush1.bf16.xpose.msra.mxu0 0
        %513 = vmatprep.subr.bf16.mxu0 0
        %514 = vmatpush1.bf16.xpose.msra.mxu0 0
        %515 = vmatprep.subr.bf16.mxu0 0
        %516 = vmatpush1.bf16.xpose.msra.mxu0 0
        %517 = vmatprep.subr.bf16.mxu0 0
        %518 = vmatpush1.bf16.xpose.msra.mxu0 0
        %519 = vmatprep.subr.bf16.mxu0 0
        %520 = vmatpush1.bf16.xpose.msra.mxu0 0
        %521 = vmatprep.subr.bf16.mxu0 0
        %522 = vmatpush1.bf16.xpose.msra.mxu0 0
        %523 = vmatprep.subr.bf16.mxu0 0
        %524 = vmatpush1.bf16.xpose.msra.mxu0 0
        %525 = vmatprep.subr.bf16.mxu0 0
        %526 = vmatpush1.bf16.xpose.msra.mxu0 0
        %527 = vmatprep.subr.bf16.mxu0 0
        %528 = vmatpush1.bf16.xpose.msra.mxu0 0
        %529 = vmatprep.subr.bf16.mxu0 0
        %530 = vmatpush1.bf16.xpose.msra.mxu0 0
        %531 = vmatprep.subr.bf16.mxu0 0
        %532 = vmatpush1.bf16.xpose.msra.mxu0 0
        %533 = vmatprep.subr.bf16.mxu0 0
        %534 = vmatpush1.bf16.xpose.msra.mxu0 0
        %535 = vmatprep.subr.bf16.mxu0 0
        %536 = vmatpush1.bf16.xpose.msra.mxu0 0
        %537 = vmatprep.subr.bf16.mxu0 0
        %538 = vmatpush1.bf16.xpose.msra.mxu0 0
        %539 = vmatprep.subr.bf16.mxu0 0
        %540 = vmatpush1.bf16.xpose.msra.mxu0 0
        %541 = vmatprep.mubr.bf16.mxu0 0
        %542 = vmatmul.mubr.bf16.gmra.mrb[0].mxu0 %v504
        %v543 = vpop.f32.mrb[0].mxu0
        %v544 = vadd.f32 0.0, %v543
        %v545 = vpop.f32.mrb[0].mxu0
        %v546 = vpop.f32.mrb[0].mxu0
        %v547 = vadd.f32 0.0, %v546
        %v548 = vpop.f32.mrb[0].mxu0
        %549 = vdwg.mxu0
        %551 = vrot.lane.b32.xlu0 %v398, 96
        %v552 = vpop.permute.xlu0 %551
        %v554 = vsel %vm402, %v398, 0
        %v557 = vsel %vm402, %v552, 0
        %559 = vmatprep.subr.bf16.mxu0 0
        %560 = vmatpush1.bf16.xpose.msra.mxu0 %v557
        %561 = vmatprep.subr.bf16.mxu0 0
        %562 = vmatpush1.bf16.xpose.msra.mxu0 0
        %563 = vmatprep.subr.bf16.mxu0 0
        %564 = vmatpush1.bf16.xpose.msra.mxu0 0
        %565 = vmatprep.subr.bf16.mxu0 0
        %566 = vmatpush1.bf16.xpose.msra.mxu0 0
        %567 = vmatprep.subr.bf16.mxu0 0
        %568 = vmatpush1.bf16.xpose.msra.mxu0 0
        %569 = vmatprep.subr.bf16.mxu0 0
        %570 = vmatpush1.bf16.xpose.msra.mxu0 0
        %571 = vmatprep.subr.bf16.mxu0 0
        %572 = vmatpush1.bf16.xpose.msra.mxu0 0
        %573 = vmatprep.subr.bf16.mxu0 0
        %574 = vmatpush1.bf16.xpose.msra.mxu0 0
        %575 = vmatprep.subr.bf16.mxu0 0
        %576 = vmatpush1.bf16.xpose.msra.mxu0 0
        %577 = vmatprep.subr.bf16.mxu0 0
        %578 = vmatpush1.bf16.xpose.msra.mxu0 0
        %579 = vmatprep.subr.bf16.mxu0 0
        %580 = vmatpush1.bf16.xpose.msra.mxu0 0
        %581 = vmatprep.subr.bf16.mxu0 0
        %582 = vmatpush1.bf16.xpose.msra.mxu0 0
        %583 = vmatprep.subr.bf16.mxu0 0
        %584 = vmatpush1.bf16.xpose.msra.mxu0 0
        %585 = vmatprep.subr.bf16.mxu0 0
        %586 = vmatpush1.bf16.xpose.msra.mxu0 0
        %587 = vmatprep.subr.bf16.mxu0 0
        %588 = vmatpush1.bf16.xpose.msra.mxu0 0
        %589 = vmatprep.subr.bf16.mxu0 0
        %590 = vmatpush1.bf16.xpose.msra.mxu0 0
        %591 = vmatprep.mubr.bf16.mxu0 0
        %592 = vmatmul.mubr.bf16.gmra.mrb[0].mxu0 %v554
        %v593 = vpop.f32.mrb[0].mxu0
        %v594 = vadd.f32 0.0, %v593
        %v595 = vpop.f32.mrb[0].mxu0
        %v596 = vpop.f32.mrb[0].mxu0
        %v597 = vadd.f32 0.0, %v596
        %v598 = vpop.f32.mrb[0].mxu0
        %599 = vdwg.mxu0
        %600 = vrot.lane.b32.xlu0 %v395, 120
        %v601 = vpop.permute.xlu0 %600
        %602 = vrot.lane.b32.xlu0 %v395, 88
        %v603 = vpop.permute.xlu0 %602
        %v605 = vsel %vm402, %v601, 0
        %v608 = vsel %vm402, %v603, 0
        %610 = vmatprep.subr.bf16.mxu0 0
        %611 = vmatpush1.bf16.xpose.msra.mxu0 %v608
        %612 = vmatprep.subr.bf16.mxu0 0
        %613 = vmatpush1.bf16.xpose.msra.mxu0 0
        %614 = vmatprep.subr.bf16.mxu0 0
        %615 = vmatpush1.bf16.xpose.msra.mxu0 0
        %616 = vmatprep.subr.bf16.mxu0 0
        %617 = vmatpush1.bf16.xpose.msra.mxu0 0
        %618 = vmatprep.subr.bf16.mxu0 0
        %619 = vmatpush1.bf16.xpose.msra.mxu0 0
        %620 = vmatprep.subr.bf16.mxu0 0
        %621 = vmatpush1.bf16.xpose.msra.mxu0 0
        %622 = vmatprep.subr.bf16.mxu0 0
        %623 = vmatpush1.bf16.xpose.msra.mxu0 0
        %624 = vmatprep.subr.bf16.mxu0 0
        %625 = vmatpush1.bf16.xpose.msra.mxu0 0
        %626 = vmatprep.subr.bf16.mxu0 0
        %627 = vmatpush1.bf16.xpose.msra.mxu0 0
        %628 = vmatprep.subr.bf16.mxu0 0
        %629 = vmatpush1.bf16.xpose.msra.mxu0 0
        %630 = vmatprep.subr.bf16.mxu0 0
        %631 = vmatpush1.bf16.xpose.msra.mxu0 0
        %632 = vmatprep.subr.bf16.mxu0 0
        %633 = vmatpush1.bf16.xpose.msra.mxu0 0
        %634 = vmatprep.subr.bf16.mxu0 0
        %635 = vmatpush1.bf16.xpose.msra.mxu0 0
        %636 = vmatprep.subr.bf16.mxu0 0
        %637 = vmatpush1.bf16.xpose.msra.mxu0 0
        %638 = vmatprep.subr.bf16.mxu0 0
        %639 = vmatpush1.bf16.xpose.msra.mxu0 0
        %640 = vmatprep.subr.bf16.mxu0 0
        %641 = vmatpush1.bf16.xpose.msra.mxu0 0
        %642 = vmatprep.mubr.bf16.mxu0 0
        %643 = vmatmul.mubr.bf16.gmra.mrb[0].mxu0 %v605
        %v644 = vpop.f32.mrb[0].mxu0
        %v645 = vadd.f32 0.0, %v644
        %v646 = vpop.f32.mrb[0].mxu0
        %v647 = vpop.f32.mrb[0].mxu0
        %v648 = vadd.f32 0.0, %v647
        %v649 = vpop.f32.mrb[0].mxu0
        %650 = vdwg.mxu0
        %651 = vrot.lane.b32.xlu0 %v396, 120
        %v652 = vpop.permute.xlu0 %651
        %653 = vrot.lane.b32.xlu0 %v396, 88
        %v654 = vpop.permute.xlu0 %653
        %v656 = vsel %vm402, %v652, 0
        %v659 = vsel %vm402, %v654, 0
        %661 = vmatprep.subr.bf16.mxu0 0
        %662 = vmatpush1.bf16.xpose.msra.mxu0 %v659
        %663 = vmatprep.subr.bf16.mxu0 0
        %664 = vmatpush1.bf16.xpose.msra.mxu0 0
        %665 = vmatprep.subr.bf16.mxu0 0
        %666 = vmatpush1.bf16.xpose.msra.mxu0 0
        %667 = vmatprep.subr.bf16.mxu0 0
        %668 = vmatpush1.bf16.xpose.msra.mxu0 0
        %669 = vmatprep.subr.bf16.mxu0 0
        %670 = vmatpush1.bf16.xpose.msra.mxu0 0
        %671 = vmatprep.subr.bf16.mxu0 0
        %672 = vmatpush1.bf16.xpose.msra.mxu0 0
        %673 = vmatprep.subr.bf16.mxu0 0
        %674 = vmatpush1.bf16.xpose.msra.mxu0 0
        %675 = vmatprep.subr.bf16.mxu0 0
        %676 = vmatpush1.bf16.xpose.msra.mxu0 0
        %677 = vmatprep.subr.bf16.mxu0 0
        %678 = vmatpush1.bf16.xpose.msra.mxu0 0
        %679 = vmatprep.subr.bf16.mxu0 0
        %680 = vmatpush1.bf16.xpose.msra.mxu0 0
        %681 = vmatprep.subr.bf16.mxu0 0
        %682 = vmatpush1.bf16.xpose.msra.mxu0 0
        %683 = vmatprep.subr.bf16.mxu0 0
        %684 = vmatpush1.bf16.xpose.msra.mxu0 0
        %685 = vmatprep.subr.bf16.mxu0 0
        %686 = vmatpush1.bf16.xpose.msra.mxu0 0
        %687 = vmatprep.subr.bf16.mxu0 0
        %688 = vmatpush1.bf16.xpose.msra.mxu0 0
        %689 = vmatprep.subr.bf16.mxu0 0
        %690 = vmatpush1.bf16.xpose.msra.mxu0 0
        %691 = vmatprep.subr.bf16.mxu0 0
        %692 = vmatpush1.bf16.xpose.msra.mxu0 0
        %693 = vmatprep.mubr.bf16.mxu0 0
        %694 = vmatmul.mubr.bf16.gmra.mrb[0].mxu0 %v656
        %v695 = vpop.f32.mrb[0].mxu0
        %v696 = vadd.f32 0.0, %v695
        %v697 = vpop.f32.mrb[0].mxu0
        %v698 = vpop.f32.mrb[0].mxu0
        %v699 = vadd.f32 0.0, %v698
        %v700 = vpop.f32.mrb[0].mxu0
        %701 = vdwg.mxu0
        %702 = vrot.lane.b32.xlu0 %v397, 120
        %v703 = vpop.permute.xlu0 %702
        %704 = vrot.lane.b32.xlu0 %v397, 88
        %v705 = vpop.permute.xlu0 %704
        %v707 = vsel %vm402, %v703, 0
        %v710 = vsel %vm402, %v705, 0
        %712 = vmatprep.subr.bf16.mxu0 0
        %713 = vmatpush1.bf16.xpose.msra.mxu0 %v710
        %714 = vmatprep.subr.bf16.mxu0 0
        %715 = vmatpush1.bf16.xpose.msra.mxu0 0
        %716 = vmatprep.subr.bf16.mxu0 0
        %717 = vmatpush1.bf16.xpose.msra.mxu0 0
        %718 = vmatprep.subr.bf16.mxu0 0
        %719 = vmatpush1.bf16.xpose.msra.mxu0 0
        %720 = vmatprep.subr.bf16.mxu0 0
        %721 = vmatpush1.bf16.xpose.msra.mxu0 0
        %722 = vmatprep.subr.bf16.mxu0 0
        %723 = vmatpush1.bf16.xpose.msra.mxu0 0
        %724 = vmatprep.subr.bf16.mxu0 0
        %725 = vmatpush1.bf16.xpose.msra.mxu0 0
        %726 = vmatprep.subr.bf16.mxu0 0
        %727 = vmatpush1.bf16.xpose.msra.mxu0 0
        %728 = vmatprep.subr.bf16.mxu0 0
        %729 = vmatpush1.bf16.xpose.msra.mxu0 0
        %730 = vmatprep.subr.bf16.mxu0 0
        %731 = vmatpush1.bf16.xpose.msra.mxu0 0
        %732 = vmatprep.subr.bf16.mxu0 0
        %733 = vmatpush1.bf16.xpose.msra.mxu0 0
        %734 = vmatprep.subr.bf16.mxu0 0
        %735 = vmatpush1.bf16.xpose.msra.mxu0 0
        %736 = vmatprep.subr.bf16.mxu0 0
        %737 = vmatpush1.bf16.xpose.msra.mxu0 0
        %738 = vmatprep.subr.bf16.mxu0 0
        %739 = vmatpush1.bf16.xpose.msra.mxu0 0
        %740 = vmatprep.subr.bf16.mxu0 0
        %741 = vmatpush1.bf16.xpose.msra.mxu0 0
        %742 = vmatprep.subr.bf16.mxu0 0
        %743 = vmatpush1.bf16.xpose.msra.mxu0 0
        %744 = vmatprep.mubr.bf16.mxu0 0
        %745 = vmatmul.mubr.bf16.gmra.mrb[0].mxu0 %v707
        %v746 = vpop.f32.mrb[0].mxu0
        %v747 = vadd.f32 0.0, %v746
        %v748 = vpop.f32.mrb[0].mxu0
        %v749 = vpop.f32.mrb[0].mxu0
        %v750 = vadd.f32 0.0, %v749
        %v751 = vpop.f32.mrb[0].mxu0
        %752 = vdwg.mxu0
        %753 = vrot.lane.b32.xlu0 %v398, 120
        %v754 = vpop.permute.xlu0 %753
        %755 = vrot.lane.b32.xlu0 %v398, 88
        %v756 = vpop.permute.xlu0 %755
        %v758 = vsel %vm402, %v754, 0
        %v761 = vsel %vm402, %v756, 0
        %763 = vmatprep.subr.bf16.mxu0 0
        %764 = vmatpush1.bf16.xpose.msra.mxu0 %v761
        %765 = vmatprep.subr.bf16.mxu0 0
        %766 = vmatpush1.bf16.xpose.msra.mxu0 0
        %767 = vmatprep.subr.bf16.mxu0 0
        %768 = vmatpush1.bf16.xpose.msra.mxu0 0
        %769 = vmatprep.subr.bf16.mxu0 0
        %770 = vmatpush1.bf16.xpose.msra.mxu0 0
        %771 = vmatprep.subr.bf16.mxu0 0
        %772 = vmatpush1.bf16.xpose.msra.mxu0 0
        %773 = vmatprep.subr.bf16.mxu0 0
        %774 = vmatpush1.bf16.xpose.msra.mxu0 0
        %775 = vmatprep.subr.bf16.mxu0 0
        %776 = vmatpush1.bf16.xpose.msra.mxu0 0
        %777 = vmatprep.subr.bf16.mxu0 0
        %778 = vmatpush1.bf16.xpose.msra.mxu0 0
        %779 = vmatprep.subr.bf16.mxu0 0
        %780 = vmatpush1.bf16.xpose.msra.mxu0 0
        %781 = vmatprep.subr.bf16.mxu0 0
        %782 = vmatpush1.bf16.xpose.msra.mxu0 0
        %783 = vmatprep.subr.bf16.mxu0 0
        %784 = vmatpush1.bf16.xpose.msra.mxu0 0
        %785 = vmatprep.subr.bf16.mxu0 0
        %786 = vmatpush1.bf16.xpose.msra.mxu0 0
        %787 = vmatprep.subr.bf16.mxu0 0
        %788 = vmatpush1.bf16.xpose.msra.mxu0 0
        %789 = vmatprep.subr.bf16.mxu0 0
        %790 = vmatpush1.bf16.xpose.msra.mxu0 0
        %791 = vmatprep.subr.bf16.mxu0 0
        %792 = vmatpush1.bf16.xpose.msra.mxu0 0
        %793 = vmatprep.subr.bf16.mxu0 0
        %794 = vmatpush1.bf16.xpose.msra.mxu0 0
        %795 = vmatprep.mubr.bf16.mxu0 0
        %796 = vmatmul.mubr.bf16.gmra.mrb[0].mxu0 %v758
        %v797 = vpop.f32.mrb[0].mxu0
        %v798 = vadd.f32 0.0, %v797
        %v799 = vpop.f32.mrb[0].mxu0
        %v800 = vpop.f32.mrb[0].mxu0
        %v801 = vadd.f32 0.0, %v800
        %v802 = vpop.f32.mrb[0].mxu0
        %803 = vdwg.mxu0
        %804 = vrot.lane.b32.xlu0 %v395, 112
        %v805 = vpop.permute.xlu0 %804
        %806 = vrot.lane.b32.xlu0 %v395, 80
        %v807 = vpop.permute.xlu0 %806
        %v809 = vsel %vm402, %v805, 0
        %v812 = vsel %vm402, %v807, 0
        %814 = vmatprep.subr.bf16.mxu0 0
        %815 = vmatpush1.bf16.xpose.msra.mxu0 %v812
        %816 = vmatprep.subr.bf16.mxu0 0
        %817 = vmatpush1.bf16.xpose.msra.mxu0 0
        %818 = vmatprep.subr.bf16.mxu0 0
        %819 = vmatpush1.bf16.xpose.msra.mxu0 0
        %820 = vmatprep.subr.bf16.mxu0 0
        %821 = vmatpush1.bf16.xpose.msra.mxu0 0
        %822 = vmatprep.subr.bf16.mxu0 0
        %823 = vmatpush1.bf16.xpose.msra.mxu0 0
        %824 = vmatprep.subr.bf16.mxu0 0
        %825 = vmatpush1.bf16.xpose.msra.mxu0 0
        %826 = vmatprep.subr.bf16.mxu0 0
        %827 = vmatpush1.bf16.xpose.msra.mxu0 0
        %828 = vmatprep.subr.bf16.mxu0 0
        %829 = vmatpush1.bf16.xpose.msra.mxu0 0
        %830 = vmatprep.subr.bf16.mxu0 0
        %831 = vmatpush1.bf16.xpose.msra.mxu0 0
        %832 = vmatprep.subr.bf16.mxu0 0
        %833 = vmatpush1.bf16.xpose.msra.mxu0 0
        %834 = vmatprep.subr.bf16.mxu0 0
        %835 = vmatpush1.bf16.xpose.msra.mxu0 0
        %836 = vmatprep.subr.bf16.mxu0 0
        %837 = vmatpush1.bf16.xpose.msra.mxu0 0
        %838 = vmatprep.subr.bf16.mxu0 0
        %839 = vmatpush1.bf16.xpose.msra.mxu0 0
        %840 = vmatprep.subr.bf16.mxu0 0
        %841 = vmatpush1.bf16.xpose.msra.mxu0 0
        %842 = vmatprep.subr.bf16.mxu0 0
        %843 = vmatpush1.bf16.xpose.msra.mxu0 0
        %844 = vmatprep.subr.bf16.mxu0 0
        %845 = vmatpush1.bf16.xpose.msra.mxu0 0
        %846 = vmatprep.mubr.bf16.mxu0 0
        %847 = vmatmul.mubr.bf16.gmra.mrb[0].mxu0 %v809
        %v848 = vpop.f32.mrb[0].mxu0
        %v849 = vadd.f32 0.0, %v848
        %v850 = vpop.f32.mrb[0].mxu0
        %v851 = vpop.f32.mrb[0].mxu0
        %v852 = vadd.f32 0.0, %v851
        %v853 = vpop.f32.mrb[0].mxu0
        %854 = vdwg.mxu0
        %855 = vrot.lane.b32.xlu0 %v396, 112
        %v856 = vpop.permute.xlu0 %855
        %857 = vrot.lane.b32.xlu0 %v396, 80
        %v858 = vpop.permute.xlu0 %857
        %v860 = vsel %vm402, %v856, 0
        %v863 = vsel %vm402, %v858, 0
        %865 = vmatprep.subr.bf16.mxu0 0
        %866 = vmatpush1.bf16.xpose.msra.mxu0 %v863
        %867 = vmatprep.subr.bf16.mxu0 0
        %868 = vmatpush1.bf16.xpose.msra.mxu0 0
        %869 = vmatprep.subr.bf16.mxu0 0
        %870 = vmatpush1.bf16.xpose.msra.mxu0 0
        %871 = vmatprep.subr.bf16.mxu0 0
        %872 = vmatpush1.bf16.xpose.msra.mxu0 0
        %873 = vmatprep.subr.bf16.mxu0 0
        %874 = vmatpush1.bf16.xpose.msra.mxu0 0
        %875 = vmatprep.subr.bf16.mxu0 0
        %876 = vmatpush1.bf16.xpose.msra.mxu0 0
        %877 = vmatprep.subr.bf16.mxu0 0
        %878 = vmatpush1.bf16.xpose.msra.mxu0 0
        %879 = vmatprep.subr.bf16.mxu0 0
        %880 = vmatpush1.bf16.xpose.msra.mxu0 0
        %881 = vmatprep.subr.bf16.mxu0 0
        %882 = vmatpush1.bf16.xpose.msra.mxu0 0
        %883 = vmatprep.subr.bf16.mxu0 0
        %884 = vmatpush1.bf16.xpose.msra.mxu0 0
        %885 = vmatprep.subr.bf16.mxu0 0
        %886 = vmatpush1.bf16.xpose.msra.mxu0 0
        %887 = vmatprep.subr.bf16.mxu0 0
        %888 = vmatpush1.bf16.xpose.msra.mxu0 0
        %889 = vmatprep.subr.bf16.mxu0 0
        %890 = vmatpush1.bf16.xpose.msra.mxu0 0
        %891 = vmatprep.subr.bf16.mxu0 0
        %892 = vmatpush1.bf16.xpose.msra.mxu0 0
        %893 = vmatprep.subr.bf16.mxu0 0
        %894 = vmatpush1.bf16.xpose.msra.mxu0 0
        %895 = vmatprep.subr.bf16.mxu0 0
        %896 = vmatpush1.bf16.xpose.msra.mxu0 0
        %897 = vmatprep.mubr.bf16.mxu0 0
        %898 = vmatmul.mubr.bf16.gmra.mrb[0].mxu0 %v860
        %v899 = vpop.f32.mrb[0].mxu0
        %v900 = vadd.f32 0.0, %v899
        %v901 = vpop.f32.mrb[0].mxu0
        %v902 = vpop.f32.mrb[0].mxu0
        %v903 = vadd.f32 0.0, %v902
        %v904 = vpop.f32.mrb[0].mxu0
        %905 = vdwg.mxu0
        %906 = vrot.lane.b32.xlu0 %v397, 112
        %v907 = vpop.permute.xlu0 %906
        %908 = vrot.lane.b32.xlu0 %v397, 80
        %v909 = vpop.permute.xlu0 %908
        %v911 = vsel %vm402, %v907, 0
        %v914 = vsel %vm402, %v909, 0
        %916 = vmatprep.subr.bf16.mxu0 0
        %917 = vmatpush1.bf16.xpose.msra.mxu0 %v914
        %918 = vmatprep.subr.bf16.mxu0 0
        %919 = vmatpush1.bf16.xpose.msra.mxu0 0
        %920 = vmatprep.subr.bf16.mxu0 0
        %921 = vmatpush1.bf16.xpose.msra.mxu0 0
        %922 = vmatprep.subr.bf16.mxu0 0
        %923 = vmatpush1.bf16.xpose.msra.mxu0 0
        %924 = vmatprep.subr.bf16.mxu0 0
        %925 = vmatpush1.bf16.xpose.msra.mxu0 0
        %926 = vmatprep.subr.bf16.mxu0 0
        %927 = vmatpush1.bf16.xpose.msra.mxu0 0
        %928 = vmatprep.subr.bf16.mxu0 0
        %929 = vmatpush1.bf16.xpose.msra.mxu0 0
        %930 = vmatprep.subr.bf16.mxu0 0
        %931 = vmatpush1.bf16.xpose.msra.mxu0 0
        %932 = vmatprep.subr.bf16.mxu0 0
        %933 = vmatpush1.bf16.xpose.msra.mxu0 0
        %934 = vmatprep.subr.bf16.mxu0 0
        %935 = vmatpush1.bf16.xpose.msra.mxu0 0
        %936 = vmatprep.subr.bf16.mxu0 0
        %937 = vmatpush1.bf16.xpose.msra.mxu0 0
        %938 = vmatprep.subr.bf16.mxu0 0
        %939 = vmatpush1.bf16.xpose.msra.mxu0 0
        %940 = vmatprep.subr.bf16.mxu0 0
        %941 = vmatpush1.bf16.xpose.msra.mxu0 0
        %942 = vmatprep.subr.bf16.mxu0 0
        %943 = vmatpush1.bf16.xpose.msra.mxu0 0
        %944 = vmatprep.subr.bf16.mxu0 0
        %945 = vmatpush1.bf16.xpose.msra.mxu0 0
        %946 = vmatprep.subr.bf16.mxu0 0
        %947 = vmatpush1.bf16.xpose.msra.mxu0 0
        %948 = vmatprep.mubr.bf16.mxu0 0
        %949 = vmatmul.mubr.bf16.gmra.mrb[0].mxu0 %v911
        %v950 = vpop.f32.mrb[0].mxu0
        %v951 = vadd.f32 0.0, %v950
        %v952 = vpop.f32.mrb[0].mxu0
        %v953 = vpop.f32.mrb[0].mxu0
        %v954 = vadd.f32 0.0, %v953
        %v955 = vpop.f32.mrb[0].mxu0
        %956 = vdwg.mxu0
        %957 = vrot.lane.b32.xlu0 %v398, 112
        %v958 = vpop.permute.xlu0 %957
        %959 = vrot.lane.b32.xlu0 %v398, 80
        %v960 = vpop.permute.xlu0 %959
        %v962 = vsel %vm402, %v958, 0
        %v965 = vsel %vm402, %v960, 0
        %967 = vmatprep.subr.bf16.mxu0 0
        %968 = vmatpush1.bf16.xpose.msra.mxu0 %v965
        %969 = vmatprep.subr.bf16.mxu0 0
        %970 = vmatpush1.bf16.xpose.msra.mxu0 0
        %971 = vmatprep.subr.bf16.mxu0 0
        %972 = vmatpush1.bf16.xpose.msra.mxu0 0
        %973 = vmatprep.subr.bf16.mxu0 0
        %974 = vmatpush1.bf16.xpose.msra.mxu0 0
        %975 = vmatprep.subr.bf16.mxu0 0
        %976 = vmatpush1.bf16.xpose.msra.mxu0 0
        %977 = vmatprep.subr.bf16.mxu0 0
        %978 = vmatpush1.bf16.xpose.msra.mxu0 0
        %979 = vmatprep.subr.bf16.mxu0 0
        %980 = vmatpush1.bf16.xpose.msra.mxu0 0
        %981 = vmatprep.subr.bf16.mxu0 0
        %982 = vmatpush1.bf16.xpose.msra.mxu0 0
        %983 = vmatprep.subr.bf16.mxu0 0
        %984 = vmatpush1.bf16.xpose.msra.mxu0 0
        %985 = vmatprep.subr.bf16.mxu0 0
        %986 = vmatpush1.bf16.xpose.msra.mxu0 0
        %987 = vmatprep.subr.bf16.mxu0 0
        %988 = vmatpush1.bf16.xpose.msra.mxu0 0
        %989 = vmatprep.subr.bf16.mxu0 0
        %990 = vmatpush1.bf16.xpose.msra.mxu0 0
        %991 = vmatprep.subr.bf16.mxu0 0
        %992 = vmatpush1.bf16.xpose.msra.mxu0 0
        %993 = vmatprep.subr.bf16.mxu0 0
        %994 = vmatpush1.bf16.xpose.msra.mxu0 0
        %995 = vmatprep.subr.bf16.mxu0 0
        %996 = vmatpush1.bf16.xpose.msra.mxu0 0
        %997 = vmatprep.subr.bf16.mxu0 0
        %998 = vmatpush1.bf16.xpose.msra.mxu0 0
        %999 = vmatprep.mubr.bf16.mxu0 0
        %1000 = vmatmul.mubr.bf16.gmra.mrb[0].mxu0 %v962
        %v1001 = vpop.f32.mrb[0].mxu0
        %v1002 = vadd.f32 0.0, %v1001
        %v1003 = vpop.f32.mrb[0].mxu0
        %v1004 = vpop.f32.mrb[0].mxu0
        %v1005 = vadd.f32 0.0, %v1004
        %v1006 = vpop.f32.mrb[0].mxu0
        %1007 = vdwg.mxu0
        %1008 = vrot.lane.b32.xlu0 %v395, 104
        %v1009 = vpop.permute.xlu0 %1008
        %1010 = vrot.lane.b32.xlu0 %v395, 72
        %v1011 = vpop.permute.xlu0 %1010
        %v1013 = vsel %vm402, %v1009, 0
        %v1016 = vsel %vm402, %v1011, 0
        %1018 = vmatprep.subr.bf16.mxu0 0
        %1019 = vmatpush1.bf16.xpose.msra.mxu0 %v1016
        %1020 = vmatprep.subr.bf16.mxu0 0
        %1021 = vmatpush1.bf16.xpose.msra.mxu0 0
        %1022 = vmatprep.subr.bf16.mxu0 0
        %1023 = vmatpush1.bf16.xpose.msra.mxu0 0
        %1024 = vmatprep.subr.bf16.mxu0 0
        %1025 = vmatpush1.bf16.xpose.msra.mxu0 0
        %1026 = vmatprep.subr.bf16.mxu0 0
        %1027 = vmatpush1.bf16.xpose.msra.mxu0 0
        %1028 = vmatprep.subr.bf16.mxu0 0
        %1029 = vmatpush1.bf16.xpose.msra.mxu0 0
        %1030 = vmatprep.subr.bf16.mxu0 0
        %1031 = vmatpush1.bf16.xpose.msra.mxu0 0
        %1032 = vmatprep.subr.bf16.mxu0 0
        %1033 = vmatpush1.bf16.xpose.msra.mxu0 0
        %1034 = vmatprep.subr.bf16.mxu0 0
        %1035 = vmatpush1.bf16.xpose.msra.mxu0 0
        %1036 = vmatprep.subr.bf16.mxu0 0
        %1037 = vmatpush1.bf16.xpose.msra.mxu0 0
        %1038 = vmatprep.subr.bf16.mxu0 0
        %1039 = vmatpush1.bf16.xpose.msra.mxu0 0
        %1040 = vmatprep.subr.bf16.mxu0 0
        %1041 = vmatpush1.bf16.xpose.msra.mxu0 0
        %1042 = vmatprep.subr.bf16.mxu0 0
        %1043 = vmatpush1.bf16.xpose.msra.mxu0 0
        %1044 = vmatprep.subr.bf16.mxu0 0
        %1045 = vmatpush1.bf16.xpose.msra.mxu0 0
        %1046 = vmatprep.subr.bf16.mxu0 0
        %1047 = vmatpush1.bf16.xpose.msra.mxu0 0
        %1048 = vmatprep.subr.bf16.mxu0 0
        %1049 = vmatpush1.bf16.xpose.msra.mxu0 0
        %1050 = vmatprep.mubr.bf16.mxu0 0
        %1051 = vmatmul.mubr.bf16.gmra.mrb[0].mxu0 %v1013
        %v1052 = vpop.f32.mrb[0].mxu0
        %v1053 = vadd.f32 0.0, %v1052
        %v1054 = vpop.f32.mrb[0].mxu0
        %v1055 = vpop.f32.mrb[0].mxu0
        %v1056 = vadd.f32 0.0, %v1055
        %v1057 = vpop.f32.mrb[0].mxu0
        %1058 = vdwg.mxu0
        %1059 = vrot.lane.b32.xlu0 %v396, 104
        %v1060 = vpop.permute.xlu0 %1059
        %1061 = vrot.lane.b32.xlu0 %v396, 72
        %v1062 = vpop.permute.xlu0 %1061
        %v1064 = vsel %vm402, %v1060, 0
        %v1067 = vsel %vm402, %v1062, 0
        %1069 = vmatprep.subr.bf16.mxu0 0
        %1070 = vmatpush1.bf16.xpose.msra.mxu0 %v1067
        %1071 = vmatprep.subr.bf16.mxu0 0
        %1072 = vmatpush1.bf16.xpose.msra.mxu0 0
        %1073 = vmatprep.subr.bf16.mxu0 0
        %1074 = vmatpush1.bf16.xpose.msra.mxu0 0
        %1075 = vmatprep.subr.bf16.mxu0 0
        %1076 = vmatpush1.bf16.xpose.msra.mxu0 0
        %1077 = vmatprep.subr.bf16.mxu0 0
        %1078 = vmatpush1.bf16.xpose.msra.mxu0 0
        %1079 = vmatprep.subr.bf16.mxu0 0
        %1080 = vmatpush1.bf16.xpose.msra.mxu0 0
        %1081 = vmatprep.subr.bf16.mxu0 0
        %1082 = vmatpush1.bf16.xpose.msra.mxu0 0
        %1083 = vmatprep.subr.bf16.mxu0 0
        %1084 = vmatpush1.bf16.xpose.msra.mxu0 0
        %1085 = vmatprep.subr.bf16.mxu0 0
        %1086 = vmatpush1.bf16.xpose.msra.mxu0 0
        %1087 = vmatprep.subr.bf16.mxu0 0
        %1088 = vmatpush1.bf16.xpose.msra.mxu0 0
        %1089 = vmatprep.subr.bf16.mxu0 0
        %1090 = vmatpush1.bf16.xpose.msra.mxu0 0
        %1091 = vmatprep.subr.bf16.mxu0 0
        %1092 = vmatpush1.bf16.xpose.msra.mxu0 0
        %1093 = vmatprep.subr.bf16.mxu0 0
        %1094 = vmatpush1.bf16.xpose.msra.mxu0 0
        %1095 = vmatprep.subr.bf16.mxu0 0
        %1096 = vmatpush1.bf16.xpose.msra.mxu0 0
        %1097 = vmatprep.subr.bf16.mxu0 0
        %1098 = vmatpush1.bf16.xpose.msra.mxu0 0
        %1099 = vmatprep.subr.bf16.mxu0 0
        %1100 = vmatpush1.bf16.xpose.msra.mxu0 0
        %1101 = vmatprep.mubr.bf16.mxu0 0
        %1102 = vmatmul.mubr.bf16.gmra.mrb[0].mxu0 %v1064
        %v1103 = vpop.f32.mrb[0].mxu0
        %v1104 = vadd.f32 0.0, %v1103
        %v1105 = vpop.f32.mrb[0].mxu0
        %v1106 = vpop.f32.mrb[0].mxu0
        %v1107 = vadd.f32 0.0, %v1106
        %v1108 = vpop.f32.mrb[0].mxu0
        %1109 = vdwg.mxu0
        %1110 = vrot.lane.b32.xlu0 %v397, 104
        %v1111 = vpop.permute.xlu0 %1110
        %1112 = vrot.lane.b32.xlu0 %v397, 72
        %v1113 = vpop.permute.xlu0 %1112
        %v1115 = vsel %vm402, %v1111, 0
        %v1118 = vsel %vm402, %v1113, 0
        %1120 = vmatprep.subr.bf16.mxu0 0
        %1121 = vmatpush1.bf16.xpose.msra.mxu0 %v1118
        %1122 = vmatprep.subr.bf16.mxu0 0
        %1123 = vmatpush1.bf16.xpose.msra.mxu0 0
        %1124 = vmatprep.subr.bf16.mxu0 0
        %1125 = vmatpush1.bf16.xpose.msra.mxu0 0
        %1126 = vmatprep.subr.bf16.mxu0 0
        %1127 = vmatpush1.bf16.xpose.msra.mxu0 0
        %1128 = vmatprep.subr.bf16.mxu0 0
        %1129 = vmatpush1.bf16.xpose.msra.mxu0 0
        %1130 = vmatprep.subr.bf16.mxu0 0
        %1131 = vmatpush1.bf16.xpose.msra.mxu0 0
        %1132 = vmatprep.subr.bf16.mxu0 0
        %1133 = vmatpush1.bf16.xpose.msra.mxu0 0
        %1134 = vmatprep.subr.bf16.mxu0 0
        %1135 = vmatpush1.bf16.xpose.msra.mxu0 0
        %1136 = vmatprep.subr.bf16.mxu0 0
        %1137 = vmatpush1.bf16.xpose.msra.mxu0 0
        %1138 = vmatprep.subr.bf16.mxu0 0
        %1139 = vmatpush1.bf16.xpose.msra.mxu0 0
        %1140 = vmatprep.subr.bf16.mxu0 0
        %1141 = vmatpush1.bf16.xpose.msra.mxu0 0
        %1142 = vmatprep.subr.bf16.mxu0 0
        %1143 = vmatpush1.bf16.xpose.msra.mxu0 0
        %1144 = vmatprep.subr.bf16.mxu0 0
        %1145 = vmatpush1.bf16.xpose.msra.mxu0 0
        %1146 = vmatprep.subr.bf16.mxu0 0
        %1147 = vmatpush1.bf16.xpose.msra.mxu0 0
        %1148 = vmatprep.subr.bf16.mxu0 0
        %1149 = vmatpush1.bf16.xpose.msra.mxu0 0
        %1150 = vmatprep.subr.bf16.mxu0 0
        %1151 = vmatpush1.bf16.xpose.msra.mxu0 0
        %1152 = vmatprep.mubr.bf16.mxu0 0
        %1153 = vmatmul.mubr.bf16.gmra.mrb[0].mxu0 %v1115
        %v1154 = vpop.f32.mrb[0].mxu0
        %v1155 = vadd.f32 0.0, %v1154
        %v1156 = vpop.f32.mrb[0].mxu0
        %v1157 = vpop.f32.mrb[0].mxu0
        %v1158 = vadd.f32 0.0, %v1157
        %v1159 = vpop.f32.mrb[0].mxu0
        %1160 = vdwg.mxu0
        %1161 = vrot.lane.b32.xlu0 %v398, 104
        %v1162 = vpop.permute.xlu0 %1161
        %1163 = vrot.lane.b32.xlu0 %v398, 72
        %v1164 = vpop.permute.xlu0 %1163
        %v1166 = vsel %vm402, %v1162, 0
        %v1169 = vsel %vm402, %v1164, 0
        %1171 = vmatprep.subr.bf16.mxu0 0
        %1172 = vmatpush1.bf16.xpose.msra.mxu0 %v1169
        %1173 = vmatprep.subr.bf16.mxu0 0
        %1174 = vmatpush1.bf16.xpose.msra.mxu0 0
        %1175 = vmatprep.subr.bf16.mxu0 0
        %1176 = vmatpush1.bf16.xpose.msra.mxu0 0
        %1177 = vmatprep.subr.bf16.mxu0 0
        %1178 = vmatpush1.bf16.xpose.msra.mxu0 0
        %1179 = vmatprep.subr.bf16.mxu0 0
        %1180 = vmatpush1.bf16.xpose.msra.mxu0 0
        %1181 = vmatprep.subr.bf16.mxu0 0
        %1182 = vmatpush1.bf16.xpose.msra.mxu0 0
        %1183 = vmatprep.subr.bf16.mxu0 0
        %1184 = vmatpush1.bf16.xpose.msra.mxu0 0
        %1185 = vmatprep.subr.bf16.mxu0 0
        %1186 = vmatpush1.bf16.xpose.msra.mxu0 0
        %1187 = vmatprep.subr.bf16.mxu0 0
        %1188 = vmatpush1.bf16.xpose.msra.mxu0 0
        %1189 = vmatprep.subr.bf16.mxu0 0
        %1190 = vmatpush1.bf16.xpose.msra.mxu0 0
        %1191 = vmatprep.subr.bf16.mxu0 0
        %1192 = vmatpush1.bf16.xpose.msra.mxu0 0
        %1193 = vmatprep.subr.bf16.mxu0 0
        %1194 = vmatpush1.bf16.xpose.msra.mxu0 0
        %1195 = vmatprep.subr.bf16.mxu0 0
        %1196 = vmatpush1.bf16.xpose.msra.mxu0 0
        %1197 = vmatprep.subr.bf16.mxu0 0
        %1198 = vmatpush1.bf16.xpose.msra.mxu0 0
        %1199 = vmatprep.subr.bf16.mxu0 0
        %1200 = vmatpush1.bf16.xpose.msra.mxu0 0
        %1201 = vmatprep.subr.bf16.mxu0 0
        %1202 = vmatpush1.bf16.xpose.msra.mxu0 0
        %1203 = vmatprep.mubr.bf16.mxu0 0
        %1204 = vmatmul.mubr.bf16.gmra.mrb[0].mxu0 %v1166
        %v1205 = vpop.f32.mrb[0].mxu0
        %v1206 = vadd.f32 0.0, %v1205
        %v1207 = vpop.f32.mrb[0].mxu0
        %v1208 = vpop.f32.mrb[0].mxu0
        %v1209 = vadd.f32 0.0, %v1208
        %v1210 = vpop.f32.mrb[0].mxu0
        %1211 = vdwg.mxu0
        %v1212 = vld [vmem:[%s278] sm:$0xff]
        %v1213 = vld [vmem:[%s278 + $0x8] sm:$0xff]
        %v1214 = vld [vmem:[%s278 + $0x10] sm:$0xff]
        %v1215 = vld [vmem:[%s278 + $0x18] sm:$0xff]
        %v1216 = vld [vmem:[%s278 + $0x20] sm:$0xff]
        %v1217 = vld [vmem:[%s278 + $0x28] sm:$0xff]
        %v1218 = vld [vmem:[%s278 + $0x30] sm:$0xff]
        %v1219 = vld [vmem:[%s278 + $0x38] sm:$0xff]
        %v1220 = vld [vmem:[%s278 + $0x40] sm:$0xff]
        %v1221 = vld [vmem:[%s278 + $0x48] sm:$0xff]
        %v1222 = vld [vmem:[%s278 + $0x50] sm:$0xff]
        %v1223 = vld [vmem:[%s278 + $0x58] sm:$0xff]
        %v1224 = vld [vmem:[%s278 + $0x60] sm:$0xff]
        %v1225 = vld [vmem:[%s278 + $0x68] sm:$0xff]
        %v1226 = vld [vmem:[%s278 + $0x70] sm:$0xff]
        %v1227 = vld [vmem:[%s278 + $0x78] sm:$0xff]
        %v1228 = vld [vmem:[%s278 + $0x80] sm:$0xff]
        %v1229 = vld [vmem:[%s278 + $0x88] sm:$0xff]
        %v1230 = vld [vmem:[%s278 + $0x90] sm:$0xff]
        %v1231 = vld [vmem:[%s278 + $0x98] sm:$0xff]
        %v1232 = vld [vmem:[%s278 + $0xa0] sm:$0xff]
        %v1233 = vld [vmem:[%s278 + $0xa8] sm:$0xff]
        %v1234 = vld [vmem:[%s278 + $0xb0] sm:$0xff]
        %v1235 = vld [vmem:[%s278 + $0xb8] sm:$0xff]
        %v1236 = vld [vmem:[%s278 + $0xc0] sm:$0xff]
        %v1237 = vld [vmem:[%s278 + $0xc8] sm:$0xff]
        %v1238 = vld [vmem:[%s278 + $0xd0] sm:$0xff]
        %v1239 = vld [vmem:[%s278 + $0xd8] sm:$0xff]
        %v1240 = vld [vmem:[%s278 + $0xe0] sm:$0xff]
        %v1241 = vld [vmem:[%s278 + $0xe8] sm:$0xff]
        %v1242 = vld [vmem:[%s278 + $0xf0] sm:$0xff]
        %v1243 = vld [vmem:[%s278 + $0xf8] sm:$0xff]
        %v1244 = vadd.f32 %v444, %v1212
        %v1245 = vadd.f32 %v447, %v1213
        %v1246 = vadd.f32 %v645, %v1214
        %v1247 = vadd.f32 %v648, %v1215
        %v1248 = vadd.f32 %v849, %v1216
        %v1249 = vadd.f32 %v852, %v1217
        %v1250 = vadd.f32 %v1053, %v1218
        %v1251 = vadd.f32 %v1056, %v1219
        %v1252 = vadd.f32 %v494, %v1220
        %v1253 = vadd.f32 %v497, %v1221
        %v1254 = vadd.f32 %v696, %v1222
        %v1255 = vadd.f32 %v699, %v1223
        %v1256 = vadd.f32 %v900, %v1224
        %v1257 = vadd.f32 %v903, %v1225
        %v1258 = vadd.f32 %v1104, %v1226
        %v1259 = vadd.f32 %v1107, %v1227
        %v1260 = vadd.f32 %v544, %v1228
        %v1261 = vadd.f32 %v547, %v1229
        %v1262 = vadd.f32 %v747, %v1230
        %v1263 = vadd.f32 %v750, %v1231
        %v1264 = vadd.f32 %v951, %v1232
        %v1265 = vadd.f32 %v954, %v1233
        %v1266 = vadd.f32 %v1155, %v1234
        %v1267 = vadd.f32 %v1158, %v1235
        %v1268 = vadd.f32 %v594, %v1236
        %v1269 = vadd.f32 %v597, %v1237
        %v1270 = vadd.f32 %v798, %v1238
        %v1271 = vadd.f32 %v801, %v1239
        %v1272 = vadd.f32 %v1002, %v1240
        %v1273 = vadd.f32 %v1005, %v1241
        %v1274 = vadd.f32 %v1206, %v1242
        %v1275 = vadd.f32 %v1209, %v1243
        %vm1276 = vcmask 130048
        %v1277 = vsel %vm1276, %v1244, -inf
        %1278 = vmax.xlane.f32.xlu0 %v1277
        %v1279 = vpop.xlane.xlu0 %1278
        %v1280 = vsel %vm1276, %v1245, -inf
        %1281 = vmax.xlane.f32.xlu0 %v1280
        %v1282 = vpop.xlane.xlu0 %1281
        %v1283 = vsel %vm1276, %v1246, -inf
        %1284 = vmax.xlane.f32.xlu0 %v1283
        %v1285 = vpop.xlane.xlu0 %1284
        %v1286 = vsel %vm1276, %v1247, -inf
        %1287 = vmax.xlane.f32.xlu0 %v1286
        %v1288 = vpop.xlane.xlu0 %1287
        %v1289 = vsel %vm1276, %v1248, -inf
        %1290 = vmax.xlane.f32.xlu0 %v1289
        %v1291 = vpop.xlane.xlu0 %1290
        %v1292 = vsel %vm1276, %v1249, -inf
        %1293 = vmax.xlane.f32.xlu0 %v1292
        %v1294 = vpop.xlane.xlu0 %1293
        %v1295 = vsel %vm1276, %v1250, -inf
        %1296 = vmax.xlane.f32.xlu0 %v1295
        %v1297 = vpop.xlane.xlu0 %1296
        %v1298 = vsel %vm1276, %v1251, -inf
        %1299 = vmax.xlane.f32.xlu0 %v1298
        %v1300 = vpop.xlane.xlu0 %1299
        %v1301 = vsel %vm1276, %v1252, -inf
        %1302 = vmax.xlane.f32.xlu0 %v1301
        %v1303 = vpop.xlane.xlu0 %1302
        %v1304 = vsel %vm1276, %v1253, -inf
        %1305 = vmax.xlane.f32.xlu0 %v1304
        %v1306 = vpop.xlane.xlu0 %1305
        %v1307 = vsel %vm1276, %v1254, -inf
        %1308 = vmax.xlane.f32.xlu0 %v1307
        %v1309 = vpop.xlane.xlu0 %1308
        %v1310 = vsel %vm1276, %v1255, -inf
        %1311 = vmax.xlane.f32.xlu0 %v1310
        %v1312 = vpop.xlane.xlu0 %1311
        %v1313 = vsel %vm1276, %v1256, -inf
        %1314 = vmax.xlane.f32.xlu0 %v1313
        %v1315 = vpop.xlane.xlu0 %1314
        %v1316 = vsel %vm1276, %v1257, -inf
        %1317 = vmax.xlane.f32.xlu0 %v1316
        %v1318 = vpop.xlane.xlu0 %1317
        %v1319 = vsel %vm1276, %v1258, -inf
        %1320 = vmax.xlane.f32.xlu0 %v1319
        %v1321 = vpop.xlane.xlu0 %1320
        %v1322 = vsel %vm1276, %v1259, -inf
        %1323 = vmax.xlane.f32.xlu0 %v1322
        %v1324 = vpop.xlane.xlu0 %1323
        %v1325 = vsel %vm1276, %v1260, -inf
        %1326 = vmax.xlane.f32.xlu0 %v1325
        %v1327 = vpop.xlane.xlu0 %1326
        %v1328 = vsel %vm1276, %v1261, -inf
        %1329 = vmax.xlane.f32.xlu0 %v1328
        %v1330 = vpop.xlane.xlu0 %1329
        %v1331 = vsel %vm1276, %v1262, -inf
        %1332 = vmax.xlane.f32.xlu0 %v1331
        %v1333 = vpop.xlane.xlu0 %1332
        %v1334 = vsel %vm1276, %v1263, -inf
        %1335 = vmax.xlane.f32.xlu0 %v1334
        %v1336 = vpop.xlane.xlu0 %1335
        %v1337 = vsel %vm1276, %v1264, -inf
        %1338 = vmax.xlane.f32.xlu0 %v1337
        %v1339 = vpop.xlane.xlu0 %1338
        %v1340 = vsel %vm1276, %v1265, -inf
        %1341 = vmax.xlane.f32.xlu0 %v1340
        %v1342 = vpop.xlane.xlu0 %1341
        %v1343 = vsel %vm1276, %v1266, -inf
        %1344 = vmax.xlane.f32.xlu0 %v1343
        %v1345 = vpop.xlane.xlu0 %1344
        %v1346 = vsel %vm1276, %v1267, -inf
        %1347 = vmax.xlane.f32.xlu0 %v1346
        %v1348 = vpop.xlane.xlu0 %1347
        %v1349 = vsel %vm1276, %v1268, -inf
        %1350 = vmax.xlane.f32.xlu0 %v1349
        %v1351 = vpop.xlane.xlu0 %1350
        %v1352 = vsel %vm1276, %v1269, -inf
        %1353 = vmax.xlane.f32.xlu0 %v1352
        %v1354 = vpop.xlane.xlu0 %1353
        %v1355 = vsel %vm1276, %v1270, -inf
        %1356 = vmax.xlane.f32.xlu0 %v1355
        %v1357 = vpop.xlane.xlu0 %1356
        %v1358 = vsel %vm1276, %v1271, -inf
        %1359 = vmax.xlane.f32.xlu0 %v1358
        %v1360 = vpop.xlane.xlu0 %1359
        %v1361 = vsel %vm1276, %v1272, -inf
        %1362 = vmax.xlane.f32.xlu0 %v1361
        %v1363 = vpop.xlane.xlu0 %1362
        %v1364 = vsel %vm1276, %v1273, -inf
        %1365 = vmax.xlane.f32.xlu0 %v1364
        %v1366 = vpop.xlane.xlu0 %1365
        %v1367 = vsel %vm1276, %v1274, -inf
        %1368 = vmax.xlane.f32.xlu0 %v1367
        %v1369 = vpop.xlane.xlu0 %1368
        %v1370 = vsel %vm1276, %v1275, -inf
        %1371 = vmax.xlane.f32.xlu0 %v1370
        %v1372 = vpop.xlane.xlu0 %1371
        %v1373 = vsub.f32 %v1244, %v1279
        %v1374 = vsub.f32 %v1245, %v1282
        %v1375 = vsub.f32 %v1246, %v1285
        %v1376 = vsub.f32 %v1247, %v1288
        %v1377 = vsub.f32 %v1248, %v1291
        %v1378 = vsub.f32 %v1249, %v1294
        %v1379 = vsub.f32 %v1250, %v1297
        %v1380 = vsub.f32 %v1251, %v1300
        %v1381 = vsub.f32 %v1252, %v1303
        %v1382 = vsub.f32 %v1253, %v1306
        %v1383 = vsub.f32 %v1254, %v1309
        %v1384 = vsub.f32 %v1255, %v1312
        %v1385 = vsub.f32 %v1256, %v1315
        %v1386 = vsub.f32 %v1257, %v1318
        %v1387 = vsub.f32 %v1258, %v1321
        %v1388 = vsub.f32 %v1259, %v1324
        %v1389 = vsub.f32 %v1260, %v1327
        %v1390 = vsub.f32 %v1261, %v1330
        %v1391 = vsub.f32 %v1262, %v1333
        %v1392 = vsub.f32 %v1263, %v1336
        %v1393 = vsub.f32 %v1264, %v1339
        %v1394 = vsub.f32 %v1265, %v1342
        %v1395 = vsub.f32 %v1266, %v1345
        %v1396 = vsub.f32 %v1267, %v1348
        %v1397 = vsub.f32 %v1268, %v1351
        %v1398 = vsub.f32 %v1269, %v1354
        %v1399 = vsub.f32 %v1270, %v1357
        %v1400 = vsub.f32 %v1271, %v1360
        %v1401 = vsub.f32 %v1272, %v1363
        %v1402 = vsub.f32 %v1273, %v1366
        %v1403 = vsub.f32 %v1274, %v1369
        %v1404 = vsub.f32 %v1275, %v1372
        %v1405 = vmul.f32 %v1373, 1.442695
        %v1406 = vpow.pop %v1405
        %v1407 = vmul.f32 %v1374, 1.442695
        %v1408 = vpow.pop %v1407
        %v1409 = vmul.f32 %v1375, 1.442695
        %v1410 = vpow.pop %v1409
        %v1411 = vmul.f32 %v1376, 1.442695
        %v1412 = vpow.pop %v1411
        %v1413 = vmul.f32 %v1377, 1.442695
        %v1414 = vpow.pop %v1413
        %v1415 = vmul.f32 %v1378, 1.442695
        %v1416 = vpow.pop %v1415
        %v1417 = vmul.f32 %v1379, 1.442695
        %v1418 = vpow.pop %v1417
        %v1419 = vmul.f32 %v1380, 1.442695
        %v1420 = vpow.pop %v1419
        %v1421 = vmul.f32 %v1381, 1.442695
        %v1422 = vpow.pop %v1421
        %v1423 = vmul.f32 %v1382, 1.442695
        %v1424 = vpow.pop %v1423
        %v1425 = vmul.f32 %v1383, 1.442695
        %v1426 = vpow.pop %v1425
        %v1427 = vmul.f32 %v1384, 1.442695
        %v1428 = vpow.pop %v1427
        %v1429 = vmul.f32 %v1385, 1.442695
        %v1430 = vpow.pop %v1429
        %v1431 = vmul.f32 %v1386, 1.442695
        %v1432 = vpow.pop %v1431
        %v1433 = vmul.f32 %v1387, 1.442695
        %v1434 = vpow.pop %v1433
        %v1435 = vmul.f32 %v1388, 1.442695
        %v1436 = vpow.pop %v1435
        %v1437 = vmul.f32 %v1389, 1.442695
        %v1438 = vpow.pop %v1437
        %v1439 = vmul.f32 %v1390, 1.442695
        %v1440 = vpow.pop %v1439
        %v1441 = vmul.f32 %v1391, 1.442695
        %v1442 = vpow.pop %v1441
        %v1443 = vmul.f32 %v1392, 1.442695
        %v1444 = vpow.pop %v1443
        %v1445 = vmul.f32 %v1393, 1.442695
        %v1446 = vpow.pop %v1445
        %v1447 = vmul.f32 %v1394, 1.442695
        %v1448 = vpow.pop %v1447
        %v1449 = vmul.f32 %v1395, 1.442695
        %v1450 = vpow.pop %v1449
        %v1451 = vmul.f32 %v1396, 1.442695
        %v1452 = vpow.pop %v1451
        %v1453 = vmul.f32 %v1397, 1.442695
        %v1454 = vpow.pop %v1453
        %v1455 = vmul.f32 %v1398, 1.442695
        %v1456 = vpow.pop %v1455
        %v1457 = vmul.f32 %v1399, 1.442695
        %v1458 = vpow.pop %v1457
        %v1459 = vmul.f32 %v1400, 1.442695
        %v1460 = vpow.pop %v1459
        %v1461 = vmul.f32 %v1401, 1.442695
        %v1462 = vpow.pop %v1461
        %v1463 = vmul.f32 %v1402, 1.442695
        %v1464 = vpow.pop %v1463
        %v1465 = vmul.f32 %v1403, 1.442695
        %v1466 = vpow.pop %v1465
        %v1467 = vmul.f32 %v1404, 1.442695
        %v1468 = vpow.pop %v1467
        %v1469 = vsel %vm1276, %v1406, 0.0
        %1470 = vadd.xlane.f32.xlu0 %v1469
        %v1471 = vpop.xlane.xlu0 %1470
        %v1472 = vsel %vm1276, %v1408, 0.0
        %1473 = vadd.xlane.f32.xlu0 %v1472
        %v1474 = vpop.xlane.xlu0 %1473
        %v1475 = vsel %vm1276, %v1410, 0.0
        %1476 = vadd.xlane.f32.xlu0 %v1475
        %v1477 = vpop.xlane.xlu0 %1476
        %v1478 = vsel %vm1276, %v1412, 0.0
        %1479 = vadd.xlane.f32.xlu0 %v1478
        %v1480 = vpop.xlane.xlu0 %1479
        %v1481 = vsel %vm1276, %v1414, 0.0
        %1482 = vadd.xlane.f32.xlu0 %v1481
        %v1483 = vpop.xlane.xlu0 %1482
        %v1484 = vsel %vm1276, %v1416, 0.0
        %1485 = vadd.xlane.f32.xlu0 %v1484
        %v1486 = vpop.xlane.xlu0 %1485
        %v1487 = vsel %vm1276, %v1418, 0.0
        %1488 = vadd.xlane.f32.xlu0 %v1487
        %v1489 = vpop.xlane.xlu0 %1488
        %v1490 = vsel %vm1276, %v1420, 0.0
        %1491 = vadd.xlane.f32.xlu0 %v1490
        %v1492 = vpop.xlane.xlu0 %1491
        %v1493 = vsel %vm1276, %v1422, 0.0
        %1494 = vadd.xlane.f32.xlu0 %v1493
        %v1495 = vpop.xlane.xlu0 %1494
        %v1496 = vsel %vm1276, %v1424, 0.0
        %1497 = vadd.xlane.f32.xlu0 %v1496
        %v1498 = vpop.xlane.xlu0 %1497
        %v1499 = vsel %vm1276, %v1426, 0.0
        %1500 = vadd.xlane.f32.xlu0 %v1499
        %v1501 = vpop.xlane.xlu0 %1500
        %v1502 = vsel %vm1276, %v1428, 0.0
        %1503 = vadd.xlane.f32.xlu0 %v1502
        %v1504 = vpop.xlane.xlu0 %1503
        %v1505 = vsel %vm1276, %v1430, 0.0
        %1506 = vadd.xlane.f32.xlu0 %v1505
        %v1507 = vpop.xlane.xlu0 %1506
        %v1508 = vsel %vm1276, %v1432, 0.0
        %1509 = vadd.xlane.f32.xlu0 %v1508
        %v1510 = vpop.xlane.xlu0 %1509
        %v1511 = vsel %vm1276, %v1434, 0.0
        %1512 = vadd.xlane.f32.xlu0 %v1511
        %v1513 = vpop.xlane.xlu0 %1512
        %v1514 = vsel %vm1276, %v1436, 0.0
        %1515 = vadd.xlane.f32.xlu0 %v1514
        %v1516 = vpop.xlane.xlu0 %1515
        %v1517 = vsel %vm1276, %v1438, 0.0
        %1518 = vadd.xlane.f32.xlu0 %v1517
        %v1519 = vpop.xlane.xlu0 %1518
        %v1520 = vsel %vm1276, %v1440, 0.0
        %1521 = vadd.xlane.f32.xlu0 %v1520
        %v1522 = vpop.xlane.xlu0 %1521
        %v1523 = vsel %vm1276, %v1442, 0.0
        %1524 = vadd.xlane.f32.xlu0 %v1523
        %v1525 = vpop.xlane.xlu0 %1524
        %v1526 = vsel %vm1276, %v1444, 0.0
        %1527 = vadd.xlane.f32.xlu0 %v1526
        %v1528 = vpop.xlane.xlu0 %1527
        %v1529 = vsel %vm1276, %v1446, 0.0
        %1530 = vadd.xlane.f32.xlu0 %v1529
        %v1531 = vpop.xlane.xlu0 %1530
        %v1532 = vsel %vm1276, %v1448, 0.0
        %1533 = vadd.xlane.f32.xlu0 %v1532
        %v1534 = vpop.xlane.xlu0 %1533
        %v1535 = vsel %vm1276, %v1450, 0.0
        %1536 = vadd.xlane.f32.xlu0 %v1535
        %v1537 = vpop.xlane.xlu0 %1536
        %v1538 = vsel %vm1276, %v1452, 0.0
        %1539 = vadd.xlane.f32.xlu0 %v1538
        %v1540 = vpop.xlane.xlu0 %1539
        %v1541 = vsel %vm1276, %v1454, 0.0
        %1542 = vadd.xlane.f32.xlu0 %v1541
        %v1543 = vpop.xlane.xlu0 %1542
        %v1544 = vsel %vm1276, %v1456, 0.0
        %1545 = vadd.xlane.f32.xlu0 %v1544
        %v1546 = vpop.xlane.xlu0 %1545
        %v1547 = vsel %vm1276, %v1458, 0.0
        %1548 = vadd.xlane.f32.xlu0 %v1547
        %v1549 = vpop.xlane.xlu0 %1548
        %v1550 = vsel %vm1276, %v1460, 0.0
        %1551 = vadd.xlane.f32.xlu0 %v1550
        %v1552 = vpop.xlane.xlu0 %1551
        %v1553 = vsel %vm1276, %v1462, 0.0
        %1554 = vadd.xlane.f32.xlu0 %v1553
        %v1555 = vpop.xlane.xlu0 %1554
        %v1556 = vsel %vm1276, %v1464, 0.0
        %1557 = vadd.xlane.f32.xlu0 %v1556
        %v1558 = vpop.xlane.xlu0 %1557
        %v1559 = vsel %vm1276, %v1466, 0.0
        %1560 = vadd.xlane.f32.xlu0 %v1559
        %v1561 = vpop.xlane.xlu0 %1560
        %v1562 = vsel %vm1276, %v1468, 0.0
        %1563 = vadd.xlane.f32.xlu0 %v1562
        %v1564 = vpop.xlane.xlu0 %1563
        %v1565 = vrcp.pop %v1471
        %v1566 = vrcp.pop %v1474
        %v1567 = vrcp.pop %v1477
        %v1568 = vrcp.pop %v1480
        %v1569 = vrcp.pop %v1483
        %v1570 = vrcp.pop %v1486
        %v1571 = vrcp.pop %v1489
        %v1572 = vrcp.pop %v1492
        %v1573 = vrcp.pop %v1495
        %v1574 = vrcp.pop %v1498
        %v1575 = vrcp.pop %v1501
        %v1576 = vrcp.pop %v1504
        %v1577 = vrcp.pop %v1507
        %v1578 = vrcp.pop %v1510
        %v1579 = vrcp.pop %v1513
        %v1580 = vrcp.pop %v1516
        %v1581 = vrcp.pop %v1519
        %v1582 = vrcp.pop %v1522
        %v1583 = vrcp.pop %v1525
        %v1584 = vrcp.pop %v1528
        %v1585 = vrcp.pop %v1531
        %v1586 = vrcp.pop %v1534
        %v1587 = vrcp.pop %v1537
        %v1588 = vrcp.pop %v1540
        %v1589 = vrcp.pop %v1543
        %v1590 = vrcp.pop %v1546
        %v1591 = vrcp.pop %v1549
        %v1592 = vrcp.pop %v1552
        %v1593 = vrcp.pop %v1555
        %v1594 = vrcp.pop %v1558
        %v1595 = vrcp.pop %v1561
        %v1596 = vrcp.pop %v1564
        %v1597 = vmul.f32 %v1406, %v1565
        %v1598 = vmul.f32 %v1408, %v1566
        %v1599 = vmul.f32 %v1410, %v1567
        %v1600 = vmul.f32 %v1412, %v1568
        %v1601 = vmul.f32 %v1414, %v1569
        %v1602 = vmul.f32 %v1416, %v1570
        %v1603 = vmul.f32 %v1418, %v1571
        %v1604 = vmul.f32 %v1420, %v1572
        %v1605 = vmul.f32 %v1422, %v1573
        %v1606 = vmul.f32 %v1424, %v1574
        %v1607 = vmul.f32 %v1426, %v1575
        %v1608 = vmul.f32 %v1428, %v1576
        %v1609 = vmul.f32 %v1430, %v1577
        %v1610 = vmul.f32 %v1432, %v1578
        %v1611 = vmul.f32 %v1434, %v1579
        %v1612 = vmul.f32 %v1436, %v1580
        %v1613 = vmul.f32 %v1438, %v1581
        %v1614 = vmul.f32 %v1440, %v1582
        %v1615 = vmul.f32 %v1442, %v1583
        %v1616 = vmul.f32 %v1444, %v1584
        %v1617 = vmul.f32 %v1446, %v1585
        %v1618 = vmul.f32 %v1448, %v1586
        %v1619 = vmul.f32 %v1450, %v1587
        %v1620 = vmul.f32 %v1452, %v1588
        %v1621 = vmul.f32 %v1454, %v1589
        %v1622 = vmul.f32 %v1456, %v1590
        %v1623 = vmul.f32 %v1458, %v1591
        %v1624 = vmul.f32 %v1460, %v1592
        %v1625 = vmul.f32 %v1462, %v1593
        %v1626 = vmul.f32 %v1464, %v1594
        %v1627 = vmul.f32 %v1466, %v1595
        %v1628 = vmul.f32 %v1468, %v1596
        %v1629 = vpack.c.bf16 %v1598, %v1597
        %v1630 = vpack.c.bf16 %v1606, %v1605
        %v1631 = vpack.c.bf16 %v1614, %v1613
        %v1632 = vpack.c.bf16 %v1622, %v1621
        %1633 = vrot.lane.b32.xlu0 %v395, 64
        %v1634 = vpop.permute.xlu0 %1633
        %v1637 = vsel %vm1276, %v1629, 0
        %1639 = vmatprep.subr.bf16.mxu0 0
        %1640 = vmatpush1.bf16.msra.mxu0 %v1634
        %1641 = vmatprep.subr.bf16.mxu0 0
        %1642 = vmatpush1.bf16.msra.mxu0 0
        %1643 = vmatprep.subr.bf16.mxu0 0
        %1644 = vmatpush1.bf16.msra.mxu0 0
        %1645 = vmatprep.subr.bf16.mxu0 0
        %1646 = vmatpush1.bf16.msra.mxu0 0
        %1647 = vmatprep.subr.bf16.mxu0 0
        %1648 = vmatpush1.bf16.msra.mxu0 0
        %1649 = vmatprep.subr.bf16.mxu0 0
        %1650 = vmatpush1.bf16.msra.mxu0 0
        %1651 = vmatprep.subr.bf16.mxu0 0
        %1652 = vmatpush1.bf16.msra.mxu0 0
        %1653 = vmatprep.subr.bf16.mxu0 0
        %1654 = vmatpush1.bf16.msra.mxu0 0
        %1655 = vmatprep.subr.bf16.mxu0 0
        %1656 = vmatpush1.bf16.msra.mxu0 0
        %1657 = vmatprep.subr.bf16.mxu0 0
        %1658 = vmatpush1.bf16.msra.mxu0 0
        %1659 = vmatprep.subr.bf16.mxu0 0
        %1660 = vmatpush1.bf16.msra.mxu0 0
        %1661 = vmatprep.subr.bf16.mxu0 0
        %1662 = vmatpush1.bf16.msra.mxu0 0
        %1663 = vmatprep.subr.bf16.mxu0 0
        %1664 = vmatpush1.bf16.msra.mxu0 0
        %1665 = vmatprep.subr.bf16.mxu0 0
        %1666 = vmatpush1.bf16.msra.mxu0 0
        %1667 = vmatprep.subr.bf16.mxu0 0
        %1668 = vmatpush1.bf16.msra.mxu0 0
        %1669 = vmatprep.subr.bf16.mxu0 0
        %1670 = vmatpush1.bf16.msra.mxu0 0
        %1671 = vmatprep.mubr.bf16.mxu0 0
        %1672 = vmatmul.mubr.bf16.gmra.mrb[0].mxu0 %v1637
        %v1673 = vpop.f32.mrb[0].mxu0
        %v1674 = vadd.f32 0.0, %v1673
        %v1675 = vpop.f32.mrb[0].mxu0
        %v1676 = vpop.f32.mrb[0].mxu0
        %v1677 = vadd.f32 0.0, %v1676
        %v1678 = vpop.f32.mrb[0].mxu0
        %1679 = vdwg.mxu0
        %1680 = vrot.lane.b32.xlu0 %v396, 64
        %v1681 = vpop.permute.xlu0 %1680
        %v1684 = vsel %vm1276, %v1630, 0
        %1686 = vmatprep.subr.bf16.mxu0 0
        %1687 = vmatpush1.bf16.msra.mxu0 %v1681
        %1688 = vmatprep.subr.bf16.mxu0 0
        %1689 = vmatpush1.bf16.msra.mxu0 0
        %1690 = vmatprep.subr.bf16.mxu0 0
        %1691 = vmatpush1.bf16.msra.mxu0 0
        %1692 = vmatprep.subr.bf16.mxu0 0
        %1693 = vmatpush1.bf16.msra.mxu0 0
        %1694 = vmatprep.subr.bf16.mxu0 0
        %1695 = vmatpush1.bf16.msra.mxu0 0
        %1696 = vmatprep.subr.bf16.mxu0 0
        %1697 = vmatpush1.bf16.msra.mxu0 0
        %1698 = vmatprep.subr.bf16.mxu0 0
        %1699 = vmatpush1.bf16.msra.mxu0 0
        %1700 = vmatprep.subr.bf16.mxu0 0
        %1701 = vmatpush1.bf16.msra.mxu0 0
        %1702 = vmatprep.subr.bf16.mxu0 0
        %1703 = vmatpush1.bf16.msra.mxu0 0
        %1704 = vmatprep.subr.bf16.mxu0 0
        %1705 = vmatpush1.bf16.msra.mxu0 0
        %1706 = vmatprep.subr.bf16.mxu0 0
        %1707 = vmatpush1.bf16.msra.mxu0 0
        %1708 = vmatprep.subr.bf16.mxu0 0
        %1709 = vmatpush1.bf16.msra.mxu0 0
        %1710 = vmatprep.subr.bf16.mxu0 0
        %1711 = vmatpush1.bf16.msra.mxu0 0
        %1712 = vmatprep.subr.bf16.mxu0 0
        %1713 = vmatpush1.bf16.msra.mxu0 0
        %1714 = vmatprep.subr.bf16.mxu0 0
        %1715 = vmatpush1.bf16.msra.mxu0 0
        %1716 = vmatprep.subr.bf16.mxu0 0
        %1717 = vmatpush1.bf16.msra.mxu0 0
        %1718 = vmatprep.mubr.bf16.mxu0 0
        %1719 = vmatmul.mubr.bf16.gmra.mrb[0].mxu0 %v1684
        %v1720 = vpop.f32.mrb[0].mxu0
        %v1721 = vadd.f32 0.0, %v1720
        %v1722 = vpop.f32.mrb[0].mxu0
        %v1723 = vpop.f32.mrb[0].mxu0
        %v1724 = vadd.f32 0.0, %v1723
        %v1725 = vpop.f32.mrb[0].mxu0
        %1726 = vdwg.mxu0
        %1727 = vrot.lane.b32.xlu0 %v397, 64
        %v1728 = vpop.permute.xlu0 %1727
        %v1731 = vsel %vm1276, %v1631, 0
        %1733 = vmatprep.subr.bf16.mxu0 0
        %1734 = vmatpush1.bf16.msra.mxu0 %v1728
        %1735 = vmatprep.subr.bf16.mxu0 0
        %1736 = vmatpush1.bf16.msra.mxu0 0
        %1737 = vmatprep.subr.bf16.mxu0 0
        %1738 = vmatpush1.bf16.msra.mxu0 0
        %1739 = vmatprep.subr.bf16.mxu0 0
        %1740 = vmatpush1.bf16.msra.mxu0 0
        %1741 = vmatprep.subr.bf16.mxu0 0
        %1742 = vmatpush1.bf16.msra.mxu0 0
        %1743 = vmatprep.subr.bf16.mxu0 0
        %1744 = vmatpush1.bf16.msra.mxu0 0
        %1745 = vmatprep.subr.bf16.mxu0 0
        %1746 = vmatpush1.bf16.msra.mxu0 0
        %1747 = vmatprep.subr.bf16.mxu0 0
        %1748 = vmatpush1.bf16.msra.mxu0 0
        %1749 = vmatprep.subr.bf16.mxu0 0
        %1750 = vmatpush1.bf16.msra.mxu0 0
        %1751 = vmatprep.subr.bf16.mxu0 0
        %1752 = vmatpush1.bf16.msra.mxu0 0
        %1753 = vmatprep.subr.bf16.mxu0 0
        %1754 = vmatpush1.bf16.msra.mxu0 0
        %1755 = vmatprep.subr.bf16.mxu0 0
        %1756 = vmatpush1.bf16.msra.mxu0 0
        %1757 = vmatprep.subr.bf16.mxu0 0
        %1758 = vmatpush1.bf16.msra.mxu0 0
        %1759 = vmatprep.subr.bf16.mxu0 0
        %1760 = vmatpush1.bf16.msra.mxu0 0
        %1761 = vmatprep.subr.bf16.mxu0 0
        %1762 = vmatpush1.bf16.msra.mxu0 0
        %1763 = vmatprep.subr.bf16.mxu0 0
        %1764 = vmatpush1.bf16.msra.mxu0 0
        %1765 = vmatprep.mubr.bf16.mxu0 0
        %1766 = vmatmul.mubr.bf16.gmra.mrb[0].mxu0 %v1731
        %v1767 = vpop.f32.mrb[0].mxu0
        %v1768 = vadd.f32 0.0, %v1767
        %v1769 = vpop.f32.mrb[0].mxu0
        %v1770 = vpop.f32.mrb[0].mxu0
        %v1771 = vadd.f32 0.0, %v1770
        %v1772 = vpop.f32.mrb[0].mxu0
        %1773 = vdwg.mxu0
        %1774 = vrot.lane.b32.xlu0 %v398, 64
        %v1775 = vpop.permute.xlu0 %1774
        %v1778 = vsel %vm1276, %v1632, 0
        %1780 = vmatprep.subr.bf16.mxu0 0
        %1781 = vmatpush1.bf16.msra.mxu0 %v1775
        %1782 = vmatprep.subr.bf16.mxu0 0
        %1783 = vmatpush1.bf16.msra.mxu0 0
        %1784 = vmatprep.subr.bf16.mxu0 0
        %1785 = vmatpush1.bf16.msra.mxu0 0
        %1786 = vmatprep.subr.bf16.mxu0 0
        %1787 = vmatpush1.bf16.msra.mxu0 0
        %1788 = vmatprep.subr.bf16.mxu0 0
        %1789 = vmatpush1.bf16.msra.mxu0 0
        %1790 = vmatprep.subr.bf16.mxu0 0
        %1791 = vmatpush1.bf16.msra.mxu0 0
        %1792 = vmatprep.subr.bf16.mxu0 0
        %1793 = vmatpush1.bf16.msra.mxu0 0
        %1794 = vmatprep.subr.bf16.mxu0 0
        %1795 = vmatpush1.bf16.msra.mxu0 0
        %1796 = vmatprep.subr.bf16.mxu0 0
        %1797 = vmatpush1.bf16.msra.mxu0 0
        %1798 = vmatprep.subr.bf16.mxu0 0
        %1799 = vmatpush1.bf16.msra.mxu0 0
        %1800 = vmatprep.subr.bf16.mxu0 0
        %1801 = vmatpush1.bf16.msra.mxu0 0
        %1802 = vmatprep.subr.bf16.mxu0 0
        %1803 = vmatpush1.bf16.msra.mxu0 0
        %1804 = vmatprep.subr.bf16.mxu0 0
        %1805 = vmatpush1.bf16.msra.mxu0 0
        %1806 = vmatprep.subr.bf16.mxu0 0
        %1807 = vmatpush1.bf16.msra.mxu0 0
        %1808 = vmatprep.subr.bf16.mxu0 0
        %1809 = vmatpush1.bf16.msra.mxu0 0
        %1810 = vmatprep.subr.bf16.mxu0 0
        %1811 = vmatpush1.bf16.msra.mxu0 0
        %1812 = vmatprep.mubr.bf16.mxu0 0
        %1813 = vmatmul.mubr.bf16.gmra.mrb[0].mxu0 %v1778
        %v1814 = vpop.f32.mrb[0].mxu0
        %v1815 = vadd.f32 0.0, %v1814
        %v1816 = vpop.f32.mrb[0].mxu0
        %v1817 = vpop.f32.mrb[0].mxu0
        %v1818 = vadd.f32 0.0, %v1817
        %v1819 = vpop.f32.mrb[0].mxu0
        %1820 = vdwg.mxu0
        %v1821 = vpack.c.bf16 %v1600, %v1599
        %v1822 = vpack.c.bf16 %v1608, %v1607
        %v1823 = vpack.c.bf16 %v1616, %v1615
        %v1824 = vpack.c.bf16 %v1624, %v1623
        %1825 = vrot.lane.b32.xlu0 %v395, 56
        %v1826 = vpop.permute.xlu0 %1825
        %v1829 = vsel %vm1276, %v1821, 0
        %1831 = vmatprep.subr.bf16.mxu0 0
        %1832 = vmatpush1.bf16.msra.mxu0 %v1826
        %1833 = vmatprep.subr.bf16.mxu0 0
        %1834 = vmatpush1.bf16.msra.mxu0 0
        %1835 = vmatprep.subr.bf16.mxu0 0
        %1836 = vmatpush1.bf16.msra.mxu0 0
        %1837 = vmatprep.subr.bf16.mxu0 0
        %1838 = vmatpush1.bf16.msra.mxu0 0
        %1839 = vmatprep.subr.bf16.mxu0 0
        %1840 = vmatpush1.bf16.msra.mxu0 0
        %1841 = vmatprep.subr.bf16.mxu0 0
        %1842 = vmatpush1.bf16.msra.mxu0 0
        %1843 = vmatprep.subr.bf16.mxu0 0
        %1844 = vmatpush1.bf16.msra.mxu0 0
        %1845 = vmatprep.subr.bf16.mxu0 0
        %1846 = vmatpush1.bf16.msra.mxu0 0
        %1847 = vmatprep.subr.bf16.mxu0 0
        %1848 = vmatpush1.bf16.msra.mxu0 0
        %1849 = vmatprep.subr.bf16.mxu0 0
        %1850 = vmatpush1.bf16.msra.mxu0 0
        %1851 = vmatprep.subr.bf16.mxu0 0
        %1852 = vmatpush1.bf16.msra.mxu0 0
        %1853 = vmatprep.subr.bf16.mxu0 0
        %1854 = vmatpush1.bf16.msra.mxu0 0
        %1855 = vmatprep.subr.bf16.mxu0 0
        %1856 = vmatpush1.bf16.msra.mxu0 0
        %1857 = vmatprep.subr.bf16.mxu0 0
        %1858 = vmatpush1.bf16.msra.mxu0 0
        %1859 = vmatprep.subr.bf16.mxu0 0
        %1860 = vmatpush1.bf16.msra.mxu0 0
        %1861 = vmatprep.subr.bf16.mxu0 0
        %1862 = vmatpush1.bf16.msra.mxu0 0
        %1863 = vmatprep.mubr.bf16.mxu0 0
        %1864 = vmatmul.mubr.bf16.gmra.mrb[0].mxu0 %v1829
        %v1865 = vpop.f32.mrb[0].mxu0
        %v1866 = vadd.f32 0.0, %v1865
        %v1867 = vpop.f32.mrb[0].mxu0
        %v1868 = vpop.f32.mrb[0].mxu0
        %v1869 = vadd.f32 0.0, %v1868
        %v1870 = vpop.f32.mrb[0].mxu0
        %1871 = vdwg.mxu0
        %1872 = vrot.lane.b32.xlu0 %v396, 56
        %v1873 = vpop.permute.xlu0 %1872
        %v1876 = vsel %vm1276, %v1822, 0
        %1878 = vmatprep.subr.bf16.mxu0 0
        %1879 = vmatpush1.bf16.msra.mxu0 %v1873
        %1880 = vmatprep.subr.bf16.mxu0 0
        %1881 = vmatpush1.bf16.msra.mxu0 0
        %1882 = vmatprep.subr.bf16.mxu0 0
        %1883 = vmatpush1.bf16.msra.mxu0 0
        %1884 = vmatprep.subr.bf16.mxu0 0
        %1885 = vmatpush1.bf16.msra.mxu0 0
        %1886 = vmatprep.subr.bf16.mxu0 0
        %1887 = vmatpush1.bf16.msra.mxu0 0
        %1888 = vmatprep.subr.bf16.mxu0 0
        %1889 = vmatpush1.bf16.msra.mxu0 0
        %1890 = vmatprep.subr.bf16.mxu0 0
        %1891 = vmatpush1.bf16.msra.mxu0 0
        %1892 = vmatprep.subr.bf16.mxu0 0
        %1893 = vmatpush1.bf16.msra.mxu0 0
        %1894 = vmatprep.subr.bf16.mxu0 0
        %1895 = vmatpush1.bf16.msra.mxu0 0
        %1896 = vmatprep.subr.bf16.mxu0 0
        %1897 = vmatpush1.bf16.msra.mxu0 0
        %1898 = vmatprep.subr.bf16.mxu0 0
        %1899 = vmatpush1.bf16.msra.mxu0 0
        %1900 = vmatprep.subr.bf16.mxu0 0
        %1901 = vmatpush1.bf16.msra.mxu0 0
        %1902 = vmatprep.subr.bf16.mxu0 0
        %1903 = vmatpush1.bf16.msra.mxu0 0
        %1904 = vmatprep.subr.bf16.mxu0 0
        %1905 = vmatpush1.bf16.msra.mxu0 0
        %1906 = vmatprep.subr.bf16.mxu0 0
        %1907 = vmatpush1.bf16.msra.mxu0 0
        %1908 = vmatprep.subr.bf16.mxu0 0
        %1909 = vmatpush1.bf16.msra.mxu0 0
        %1910 = vmatprep.mubr.bf16.mxu0 0
        %1911 = vmatmul.mubr.bf16.gmra.mrb[0].mxu0 %v1876
        %v1912 = vpop.f32.mrb[0].mxu0
        %v1913 = vadd.f32 0.0, %v1912
        %v1914 = vpop.f32.mrb[0].mxu0
        %v1915 = vpop.f32.mrb[0].mxu0
        %v1916 = vadd.f32 0.0, %v1915
        %v1917 = vpop.f32.mrb[0].mxu0
        %1918 = vdwg.mxu0
        %1919 = vrot.lane.b32.xlu0 %v397, 56
        %v1920 = vpop.permute.xlu0 %1919
        %v1923 = vsel %vm1276, %v1823, 0
        %1925 = vmatprep.subr.bf16.mxu0 0
        %1926 = vmatpush1.bf16.msra.mxu0 %v1920
        %1927 = vmatprep.subr.bf16.mxu0 0
        %1928 = vmatpush1.bf16.msra.mxu0 0
        %1929 = vmatprep.subr.bf16.mxu0 0
        %1930 = vmatpush1.bf16.msra.mxu0 0
        %1931 = vmatprep.subr.bf16.mxu0 0
        %1932 = vmatpush1.bf16.msra.mxu0 0
        %1933 = vmatprep.subr.bf16.mxu0 0
        %1934 = vmatpush1.bf16.msra.mxu0 0
        %1935 = vmatprep.subr.bf16.mxu0 0
        %1936 = vmatpush1.bf16.msra.mxu0 0
        %1937 = vmatprep.subr.bf16.mxu0 0
        %1938 = vmatpush1.bf16.msra.mxu0 0
        %1939 = vmatprep.subr.bf16.mxu0 0
        %1940 = vmatpush1.bf16.msra.mxu0 0
        %1941 = vmatprep.subr.bf16.mxu0 0
        %1942 = vmatpush1.bf16.msra.mxu0 0
        %1943 = vmatprep.subr.bf16.mxu0 0
        %1944 = vmatpush1.bf16.msra.mxu0 0
        %1945 = vmatprep.subr.bf16.mxu0 0
        %1946 = vmatpush1.bf16.msra.mxu0 0
        %1947 = vmatprep.subr.bf16.mxu0 0
        %1948 = vmatpush1.bf16.msra.mxu0 0
        %1949 = vmatprep.subr.bf16.mxu0 0
        %1950 = vmatpush1.bf16.msra.mxu0 0
        %1951 = vmatprep.subr.bf16.mxu0 0
        %1952 = vmatpush1.bf16.msra.mxu0 0
        %1953 = vmatprep.subr.bf16.mxu0 0
        %1954 = vmatpush1.bf16.msra.mxu0 0
        %1955 = vmatprep.subr.bf16.mxu0 0
        %1956 = vmatpush1.bf16.msra.mxu0 0
        %1957 = vmatprep.mubr.bf16.mxu0 0
        %1958 = vmatmul.mubr.bf16.gmra.mrb[0].mxu0 %v1923
        %v1959 = vpop.f32.mrb[0].mxu0
        %v1960 = vadd.f32 0.0, %v1959
        %v1961 = vpop.f32.mrb[0].mxu0
        %v1962 = vpop.f32.mrb[0].mxu0
        %v1963 = vadd.f32 0.0, %v1962
        %v1964 = vpop.f32.mrb[0].mxu0
        %1965 = vdwg.mxu0
        %1966 = vrot.lane.b32.xlu0 %v398, 56
        %v1967 = vpop.permute.xlu0 %1966
        %v1970 = vsel %vm1276, %v1824, 0
        %1972 = vmatprep.subr.bf16.mxu0 0
        %1973 = vmatpush1.bf16.msra.mxu0 %v1967
        %1974 = vmatprep.subr.bf16.mxu0 0
        %1975 = vmatpush1.bf16.msra.mxu0 0
        %1976 = vmatprep.subr.bf16.mxu0 0
        %1977 = vmatpush1.bf16.msra.mxu0 0
        %1978 = vmatprep.subr.bf16.mxu0 0
        %1979 = vmatpush1.bf16.msra.mxu0 0
        %1980 = vmatprep.subr.bf16.mxu0 0
        %1981 = vmatpush1.bf16.msra.mxu0 0
        %1982 = vmatprep.subr.bf16.mxu0 0
        %1983 = vmatpush1.bf16.msra.mxu0 0
        %1984 = vmatprep.subr.bf16.mxu0 0
        %1985 = vmatpush1.bf16.msra.mxu0 0
        %1986 = vmatprep.subr.bf16.mxu0 0
        %1987 = vmatpush1.bf16.msra.mxu0 0
        %1988 = vmatprep.subr.bf16.mxu0 0
        %1989 = vmatpush1.bf16.msra.mxu0 0
        %1990 = vmatprep.subr.bf16.mxu0 0
        %1991 = vmatpush1.bf16.msra.mxu0 0
        %1992 = vmatprep.subr.bf16.mxu0 0
        %1993 = vmatpush1.bf16.msra.mxu0 0
        %1994 = vmatprep.subr.bf16.mxu0 0
        %1995 = vmatpush1.bf16.msra.mxu0 0
        %1996 = vmatprep.subr.bf16.mxu0 0
        %1997 = vmatpush1.bf16.msra.mxu0 0
        %1998 = vmatprep.subr.bf16.mxu0 0
        %1999 = vmatpush1.bf16.msra.mxu0 0
        %2000 = vmatprep.subr.bf16.mxu0 0
        %2001 = vmatpush1.bf16.msra.mxu0 0
        %2002 = vmatprep.subr.bf16.mxu0 0
        %2003 = vmatpush1.bf16.msra.mxu0 0
        %2004 = vmatprep.mubr.bf16.mxu0 0
        %2005 = vmatmul.mubr.bf16.gmra.mrb[0].mxu0 %v1970
        %v2006 = vpop.f32.mrb[0].mxu0
        %v2007 = vadd.f32 0.0, %v2006
        %v2008 = vpop.f32.mrb[0].mxu0
        %v2009 = vpop.f32.mrb[0].mxu0
        %v2010 = vadd.f32 0.0, %v2009
        %v2011 = vpop.f32.mrb[0].mxu0
        %2012 = vdwg.mxu0
        %v2013 = vpack.c.bf16 %v1602, %v1601
        %v2014 = vpack.c.bf16 %v1610, %v1609
        %v2015 = vpack.c.bf16 %v1618, %v1617
        %v2016 = vpack.c.bf16 %v1626, %v1625
        %2017 = vrot.lane.b32.xlu0 %v395, 48
        %v2018 = vpop.permute.xlu0 %2017
        %v2021 = vsel %vm1276, %v2013, 0
        %2023 = vmatprep.subr.bf16.mxu0 0
        %2024 = vmatpush1.bf16.msra.mxu0 %v2018
        %2025 = vmatprep.subr.bf16.mxu0 0
        %2026 = vmatpush1.bf16.msra.mxu0 0
        %2027 = vmatprep.subr.bf16.mxu0 0
        %2028 = vmatpush1.bf16.msra.mxu0 0
        %2029 = vmatprep.subr.bf16.mxu0 0
        %2030 = vmatpush1.bf16.msra.mxu0 0
        %2031 = vmatprep.subr.bf16.mxu0 0
        %2032 = vmatpush1.bf16.msra.mxu0 0
        %2033 = vmatprep.subr.bf16.mxu0 0
        %2034 = vmatpush1.bf16.msra.mxu0 0
        %2035 = vmatprep.subr.bf16.mxu0 0
        %2036 = vmatpush1.bf16.msra.mxu0 0
        %2037 = vmatprep.subr.bf16.mxu0 0
        %2038 = vmatpush1.bf16.msra.mxu0 0
        %2039 = vmatprep.subr.bf16.mxu0 0
        %2040 = vmatpush1.bf16.msra.mxu0 0
        %2041 = vmatprep.subr.bf16.mxu0 0
        %2042 = vmatpush1.bf16.msra.mxu0 0
        %2043 = vmatprep.subr.bf16.mxu0 0
        %2044 = vmatpush1.bf16.msra.mxu0 0
        %2045 = vmatprep.subr.bf16.mxu0 0
        %2046 = vmatpush1.bf16.msra.mxu0 0
        %2047 = vmatprep.subr.bf16.mxu0 0
        %2048 = vmatpush1.bf16.msra.mxu0 0
        %2049 = vmatprep.subr.bf16.mxu0 0
        %2050 = vmatpush1.bf16.msra.mxu0 0
        %2051 = vmatprep.subr.bf16.mxu0 0
        %2052 = vmatpush1.bf16.msra.mxu0 0
        %2053 = vmatprep.subr.bf16.mxu0 0
        %2054 = vmatpush1.bf16.msra.mxu0 0
        %2055 = vmatprep.mubr.bf16.mxu0 0
        %2056 = vmatmul.mubr.bf16.gmra.mrb[0].mxu0 %v2021
        %v2057 = vpop.f32.mrb[0].mxu0
        %v2058 = vadd.f32 0.0, %v2057
        %v2059 = vpop.f32.mrb[0].mxu0
        %v2060 = vpop.f32.mrb[0].mxu0
        %v2061 = vadd.f32 0.0, %v2060
        %v2062 = vpop.f32.mrb[0].mxu0
        %2063 = vdwg.mxu0
        %2064 = vrot.lane.b32.xlu0 %v396, 48
        %v2065 = vpop.permute.xlu0 %2064
        %v2068 = vsel %vm1276, %v2014, 0
        %2070 = vmatprep.subr.bf16.mxu0 0
        %2071 = vmatpush1.bf16.msra.mxu0 %v2065
        %2072 = vmatprep.subr.bf16.mxu0 0
        %2073 = vmatpush1.bf16.msra.mxu0 0
        %2074 = vmatprep.subr.bf16.mxu0 0
        %2075 = vmatpush1.bf16.msra.mxu0 0
        %2076 = vmatprep.subr.bf16.mxu0 0
        %2077 = vmatpush1.bf16.msra.mxu0 0
        %2078 = vmatprep.subr.bf16.mxu0 0
        %2079 = vmatpush1.bf16.msra.mxu0 0
        %2080 = vmatprep.subr.bf16.mxu0 0
        %2081 = vmatpush1.bf16.msra.mxu0 0
        %2082 = vmatprep.subr.bf16.mxu0 0
        %2083 = vmatpush1.bf16.msra.mxu0 0
        %2084 = vmatprep.subr.bf16.mxu0 0
        %2085 = vmatpush1.bf16.msra.mxu0 0
        %2086 = vmatprep.subr.bf16.mxu0 0
        %2087 = vmatpush1.bf16.msra.mxu0 0
        %2088 = vmatprep.subr.bf16.mxu0 0
        %2089 = vmatpush1.bf16.msra.mxu0 0
        %2090 = vmatprep.subr.bf16.mxu0 0
        %2091 = vmatpush1.bf16.msra.mxu0 0
        %2092 = vmatprep.subr.bf16.mxu0 0
        %2093 = vmatpush1.bf16.msra.mxu0 0
        %2094 = vmatprep.subr.bf16.mxu0 0
        %2095 = vmatpush1.bf16.msra.mxu0 0
        %2096 = vmatprep.subr.bf16.mxu0 0
        %2097 = vmatpush1.bf16.msra.mxu0 0
        %2098 = vmatprep.subr.bf16.mxu0 0
        %2099 = vmatpush1.bf16.msra.mxu0 0
        %2100 = vmatprep.subr.bf16.mxu0 0
        %2101 = vmatpush1.bf16.msra.mxu0 0
        %2102 = vmatprep.mubr.bf16.mxu0 0
        %2103 = vmatmul.mubr.bf16.gmra.mrb[0].mxu0 %v2068
        %v2104 = vpop.f32.mrb[0].mxu0
        %v2105 = vadd.f32 0.0, %v2104
        %v2106 = vpop.f32.mrb[0].mxu0
        %v2107 = vpop.f32.mrb[0].mxu0
        %v2108 = vadd.f32 0.0, %v2107
        %v2109 = vpop.f32.mrb[0].mxu0
        %2110 = vdwg.mxu0
        %2111 = vrot.lane.b32.xlu0 %v397, 48
        %v2112 = vpop.permute.xlu0 %2111
        %v2115 = vsel %vm1276, %v2015, 0
        %2117 = vmatprep.subr.bf16.mxu0 0
        %2118 = vmatpush1.bf16.msra.mxu0 %v2112
        %2119 = vmatprep.subr.bf16.mxu0 0
        %2120 = vmatpush1.bf16.msra.mxu0 0
        %2121 = vmatprep.subr.bf16.mxu0 0
        %2122 = vmatpush1.bf16.msra.mxu0 0
        %2123 = vmatprep.subr.bf16.mxu0 0
        %2124 = vmatpush1.bf16.msra.mxu0 0
        %2125 = vmatprep.subr.bf16.mxu0 0
        %2126 = vmatpush1.bf16.msra.mxu0 0
        %2127 = vmatprep.subr.bf16.mxu0 0
        %2128 = vmatpush1.bf16.msra.mxu0 0
        %2129 = vmatprep.subr.bf16.mxu0 0
        %2130 = vmatpush1.bf16.msra.mxu0 0
        %2131 = vmatprep.subr.bf16.mxu0 0
        %2132 = vmatpush1.bf16.msra.mxu0 0
        %2133 = vmatprep.subr.bf16.mxu0 0
        %2134 = vmatpush1.bf16.msra.mxu0 0
        %2135 = vmatprep.subr.bf16.mxu0 0
        %2136 = vmatpush1.bf16.msra.mxu0 0
        %2137 = vmatprep.subr.bf16.mxu0 0
        %2138 = vmatpush1.bf16.msra.mxu0 0
        %2139 = vmatprep.subr.bf16.mxu0 0
        %2140 = vmatpush1.bf16.msra.mxu0 0
        %2141 = vmatprep.subr.bf16.mxu0 0
        %2142 = vmatpush1.bf16.msra.mxu0 0
        %2143 = vmatprep.subr.bf16.mxu0 0
        %2144 = vmatpush1.bf16.msra.mxu0 0
        %2145 = vmatprep.subr.bf16.mxu0 0
        %2146 = vmatpush1.bf16.msra.mxu0 0
        %2147 = vmatprep.subr.bf16.mxu0 0
        %2148 = vmatpush1.bf16.msra.mxu0 0
        %2149 = vmatprep.mubr.bf16.mxu0 0
        %2150 = vmatmul.mubr.bf16.gmra.mrb[0].mxu0 %v2115
        %v2151 = vpop.f32.mrb[0].mxu0
        %v2152 = vadd.f32 0.0, %v2151
        %v2153 = vpop.f32.mrb[0].mxu0
        %v2154 = vpop.f32.mrb[0].mxu0
        %v2155 = vadd.f32 0.0, %v2154
        %v2156 = vpop.f32.mrb[0].mxu0
        %2157 = vdwg.mxu0
        %2158 = vrot.lane.b32.xlu0 %v398, 48
        %v2159 = vpop.permute.xlu0 %2158
        %v2162 = vsel %vm1276, %v2016, 0
        %2164 = vmatprep.subr.bf16.mxu0 0
        %2165 = vmatpush1.bf16.msra.mxu0 %v2159
        %2166 = vmatprep.subr.bf16.mxu0 0
        %2167 = vmatpush1.bf16.msra.mxu0 0
        %2168 = vmatprep.subr.bf16.mxu0 0
        %2169 = vmatpush1.bf16.msra.mxu0 0
        %2170 = vmatprep.subr.bf16.mxu0 0
        %2171 = vmatpush1.bf16.msra.mxu0 0
        %2172 = vmatprep.subr.bf16.mxu0 0
        %2173 = vmatpush1.bf16.msra.mxu0 0
        %2174 = vmatprep.subr.bf16.mxu0 0
        %2175 = vmatpush1.bf16.msra.mxu0 0
        %2176 = vmatprep.subr.bf16.mxu0 0
        %2177 = vmatpush1.bf16.msra.mxu0 0
        %2178 = vmatprep.subr.bf16.mxu0 0
        %2179 = vmatpush1.bf16.msra.mxu0 0
        %2180 = vmatprep.subr.bf16.mxu0 0
        %2181 = vmatpush1.bf16.msra.mxu0 0
        %2182 = vmatprep.subr.bf16.mxu0 0
        %2183 = vmatpush1.bf16.msra.mxu0 0
        %2184 = vmatprep.subr.bf16.mxu0 0
        %2185 = vmatpush1.bf16.msra.mxu0 0
        %2186 = vmatprep.subr.bf16.mxu0 0
        %2187 = vmatpush1.bf16.msra.mxu0 0
        %2188 = vmatprep.subr.bf16.mxu0 0
        %2189 = vmatpush1.bf16.msra.mxu0 0
        %2190 = vmatprep.subr.bf16.mxu0 0
        %2191 = vmatpush1.bf16.msra.mxu0 0
        %2192 = vmatprep.subr.bf16.mxu0 0
        %2193 = vmatpush1.bf16.msra.mxu0 0
        %2194 = vmatprep.subr.bf16.mxu0 0
        %2195 = vmatpush1.bf16.msra.mxu0 0
        %2196 = vmatprep.mubr.bf16.mxu0 0
        %2197 = vmatmul.mubr.bf16.gmra.mrb[0].mxu0 %v2162
        %v2198 = vpop.f32.mrb[0].mxu0
        %v2199 = vadd.f32 0.0, %v2198
        %v2200 = vpop.f32.mrb[0].mxu0
        %v2201 = vpop.f32.mrb[0].mxu0
        %v2202 = vadd.f32 0.0, %v2201
        %v2203 = vpop.f32.mrb[0].mxu0
        %2204 = vdwg.mxu0
        %v2205 = vpack.c.bf16 %v1604, %v1603
        %v2206 = vpack.c.bf16 %v1612, %v1611
        %v2207 = vpack.c.bf16 %v1620, %v1619
        %v2208 = vpack.c.bf16 %v1628, %v1627
        %2209 = vrot.lane.b32.xlu0 %v395, 40
        %v2210 = vpop.permute.xlu0 %2209
        %v2213 = vsel %vm1276, %v2205, 0
        %2215 = vmatprep.subr.bf16.mxu0 0
        %2216 = vmatpush1.bf16.msra.mxu0 %v2210
        %2217 = vmatprep.subr.bf16.mxu0 0
        %2218 = vmatpush1.bf16.msra.mxu0 0
        %2219 = vmatprep.subr.bf16.mxu0 0
        %2220 = vmatpush1.bf16.msra.mxu0 0
        %2221 = vmatprep.subr.bf16.mxu0 0
        %2222 = vmatpush1.bf16.msra.mxu0 0
        %2223 = vmatprep.subr.bf16.mxu0 0
        %2224 = vmatpush1.bf16.msra.mxu0 0
        %2225 = vmatprep.subr.bf16.mxu0 0
        %2226 = vmatpush1.bf16.msra.mxu0 0
        %2227 = vmatprep.subr.bf16.mxu0 0
        %2228 = vmatpush1.bf16.msra.mxu0 0
        %2229 = vmatprep.subr.bf16.mxu0 0
        %2230 = vmatpush1.bf16.msra.mxu0 0
        %2231 = vmatprep.subr.bf16.mxu0 0
        %2232 = vmatpush1.bf16.msra.mxu0 0
        %2233 = vmatprep.subr.bf16.mxu0 0
        %2234 = vmatpush1.bf16.msra.mxu0 0
        %2235 = vmatprep.subr.bf16.mxu0 0
        %2236 = vmatpush1.bf16.msra.mxu0 0
        %2237 = vmatprep.subr.bf16.mxu0 0
        %2238 = vmatpush1.bf16.msra.mxu0 0
        %2239 = vmatprep.subr.bf16.mxu0 0
        %2240 = vmatpush1.bf16.msra.mxu0 0
        %2241 = vmatprep.subr.bf16.mxu0 0
        %2242 = vmatpush1.bf16.msra.mxu0 0
        %2243 = vmatprep.subr.bf16.mxu0 0
        %2244 = vmatpush1.bf16.msra.mxu0 0
        %2245 = vmatprep.subr.bf16.mxu0 0
        %2246 = vmatpush1.bf16.msra.mxu0 0
        %2247 = vmatprep.mubr.bf16.mxu0 0
        %2248 = vmatmul.mubr.bf16.gmra.mrb[0].mxu0 %v2213
        %v2249 = vpop.f32.mrb[0].mxu0
        %v2250 = vadd.f32 0.0, %v2249
        %v2251 = vpop.f32.mrb[0].mxu0
        %v2252 = vpop.f32.mrb[0].mxu0
        %v2253 = vadd.f32 0.0, %v2252
        %v2254 = vpop.f32.mrb[0].mxu0
        %2255 = vdwg.mxu0
        %2256 = vrot.lane.b32.xlu0 %v396, 40
        %v2257 = vpop.permute.xlu0 %2256
        %v2260 = vsel %vm1276, %v2206, 0
        %2262 = vmatprep.subr.bf16.mxu0 0
        %2263 = vmatpush1.bf16.msra.mxu0 %v2257
        %2264 = vmatprep.subr.bf16.mxu0 0
        %2265 = vmatpush1.bf16.msra.mxu0 0
        %2266 = vmatprep.subr.bf16.mxu0 0
        %2267 = vmatpush1.bf16.msra.mxu0 0
        %2268 = vmatprep.subr.bf16.mxu0 0
        %2269 = vmatpush1.bf16.msra.mxu0 0
        %2270 = vmatprep.subr.bf16.mxu0 0
        %2271 = vmatpush1.bf16.msra.mxu0 0
        %2272 = vmatprep.subr.bf16.mxu0 0
        %2273 = vmatpush1.bf16.msra.mxu0 0
        %2274 = vmatprep.subr.bf16.mxu0 0
        %2275 = vmatpush1.bf16.msra.mxu0 0
        %2276 = vmatprep.subr.bf16.mxu0 0
        %2277 = vmatpush1.bf16.msra.mxu0 0
        %2278 = vmatprep.subr.bf16.mxu0 0
        %2279 = vmatpush1.bf16.msra.mxu0 0
        %2280 = vmatprep.subr.bf16.mxu0 0
        %2281 = vmatpush1.bf16.msra.mxu0 0
        %2282 = vmatprep.subr.bf16.mxu0 0
        %2283 = vmatpush1.bf16.msra.mxu0 0
        %2284 = vmatprep.subr.bf16.mxu0 0
        %2285 = vmatpush1.bf16.msra.mxu0 0
        %2286 = vmatprep.subr.bf16.mxu0 0
        %2287 = vmatpush1.bf16.msra.mxu0 0
        %2288 = vmatprep.subr.bf16.mxu0 0
        %2289 = vmatpush1.bf16.msra.mxu0 0
        %2290 = vmatprep.subr.bf16.mxu0 0
        %2291 = vmatpush1.bf16.msra.mxu0 0
        %2292 = vmatprep.subr.bf16.mxu0 0
        %2293 = vmatpush1.bf16.msra.mxu0 0
        %2294 = vmatprep.mubr.bf16.mxu0 0
        %2295 = vmatmul.mubr.bf16.gmra.mrb[0].mxu0 %v2260
        %v2296 = vpop.f32.mrb[0].mxu0
        %v2297 = vadd.f32 0.0, %v2296
        %v2298 = vpop.f32.mrb[0].mxu0
        %v2299 = vpop.f32.mrb[0].mxu0
        %v2300 = vadd.f32 0.0, %v2299
        %v2301 = vpop.f32.mrb[0].mxu0
        %2302 = vdwg.mxu0
        %2303 = vrot.lane.b32.xlu0 %v397, 40
        %v2304 = vpop.permute.xlu0 %2303
        %v2307 = vsel %vm1276, %v2207, 0
        %2309 = vmatprep.subr.bf16.mxu0 0
        %2310 = vmatpush1.bf16.msra.mxu0 %v2304
        %2311 = vmatprep.subr.bf16.mxu0 0
        %2312 = vmatpush1.bf16.msra.mxu0 0
        %2313 = vmatprep.subr.bf16.mxu0 0
        %2314 = vmatpush1.bf16.msra.mxu0 0
        %2315 = vmatprep.subr.bf16.mxu0 0
        %2316 = vmatpush1.bf16.msra.mxu0 0
        %2317 = vmatprep.subr.bf16.mxu0 0
        %2318 = vmatpush1.bf16.msra.mxu0 0
        %2319 = vmatprep.subr.bf16.mxu0 0
        %2320 = vmatpush1.bf16.msra.mxu0 0
        %2321 = vmatprep.subr.bf16.mxu0 0
        %2322 = vmatpush1.bf16.msra.mxu0 0
        %2323 = vmatprep.subr.bf16.mxu0 0
        %2324 = vmatpush1.bf16.msra.mxu0 0
        %2325 = vmatprep.subr.bf16.mxu0 0
        %2326 = vmatpush1.bf16.msra.mxu0 0
        %2327 = vmatprep.subr.bf16.mxu0 0
        %2328 = vmatpush1.bf16.msra.mxu0 0
        %2329 = vmatprep.subr.bf16.mxu0 0
        %2330 = vmatpush1.bf16.msra.mxu0 0
        %2331 = vmatprep.subr.bf16.mxu0 0
        %2332 = vmatpush1.bf16.msra.mxu0 0
        %2333 = vmatprep.subr.bf16.mxu0 0
        %2334 = vmatpush1.bf16.msra.mxu0 0
        %2335 = vmatprep.subr.bf16.mxu0 0
        %2336 = vmatpush1.bf16.msra.mxu0 0
        %2337 = vmatprep.subr.bf16.mxu0 0
        %2338 = vmatpush1.bf16.msra.mxu0 0
        %2339 = vmatprep.subr.bf16.mxu0 0
        %2340 = vmatpush1.bf16.msra.mxu0 0
        %2341 = vmatprep.mubr.bf16.mxu0 0
        %2342 = vmatmul.mubr.bf16.gmra.mrb[0].mxu0 %v2307
        %v2343 = vpop.f32.mrb[0].mxu0
        %v2344 = vadd.f32 0.0, %v2343
        %v2345 = vpop.f32.mrb[0].mxu0
        %v2346 = vpop.f32.mrb[0].mxu0
        %v2347 = vadd.f32 0.0, %v2346
        %v2348 = vpop.f32.mrb[0].mxu0
        %2349 = vdwg.mxu0
        %2350 = vrot.lane.b32.xlu0 %v398, 40
        %v2351 = vpop.permute.xlu0 %2350
        %v2354 = vsel %vm1276, %v2208, 0
        %2356 = vmatprep.subr.bf16.mxu0 0
        %2357 = vmatpush1.bf16.msra.mxu0 %v2351
        %2358 = vmatprep.subr.bf16.mxu0 0
        %2359 = vmatpush1.bf16.msra.mxu0 0
        %2360 = vmatprep.subr.bf16.mxu0 0
        %2361 = vmatpush1.bf16.msra.mxu0 0
        %2362 = vmatprep.subr.bf16.mxu0 0
        %2363 = vmatpush1.bf16.msra.mxu0 0
        %2364 = vmatprep.subr.bf16.mxu0 0
        %2365 = vmatpush1.bf16.msra.mxu0 0
        %2366 = vmatprep.subr.bf16.mxu0 0
        %2367 = vmatpush1.bf16.msra.mxu0 0
        %2368 = vmatprep.subr.bf16.mxu0 0
        %2369 = vmatpush1.bf16.msra.mxu0 0
        %2370 = vmatprep.subr.bf16.mxu0 0
        %2371 = vmatpush1.bf16.msra.mxu0 0
        %2372 = vmatprep.subr.bf16.mxu0 0
        %2373 = vmatpush1.bf16.msra.mxu0 0
        %2374 = vmatprep.subr.bf16.mxu0 0
        %2375 = vmatpush1.bf16.msra.mxu0 0
        %2376 = vmatprep.subr.bf16.mxu0 0
        %2377 = vmatpush1.bf16.msra.mxu0 0
        %2378 = vmatprep.subr.bf16.mxu0 0
        %2379 = vmatpush1.bf16.msra.mxu0 0
        %2380 = vmatprep.subr.bf16.mxu0 0
        %2381 = vmatpush1.bf16.msra.mxu0 0
        %2382 = vmatprep.subr.bf16.mxu0 0
        %2383 = vmatpush1.bf16.msra.mxu0 0
        %2384 = vmatprep.subr.bf16.mxu0 0
        %2385 = vmatpush1.bf16.msra.mxu0 0
        %2386 = vmatprep.subr.bf16.mxu0 0
        %2387 = vmatpush1.bf16.msra.mxu0 0
        %2388 = vmatprep.mubr.bf16.mxu0 0
        %2389 = vmatmul.mubr.bf16.gmra.mrb[0].mxu0 %v2354
        %v2390 = vpop.f32.mrb[0].mxu0
        %v2391 = vadd.f32 0.0, %v2390
        %v2392 = vpop.f32.mrb[0].mxu0
        %v2393 = vpop.f32.mrb[0].mxu0
        %v2394 = vadd.f32 0.0, %v2393
        %v2395 = vpop.f32.mrb[0].mxu0
        %2396 = vdwg.mxu0
        %2405 = vrot.lane.b32.xlu0 %v1866, 8
        %v2406 = vpop.permute.xlu0 %2405
        %2407 = vrot.lane.b32.xlu0 %v1869, 8
        %v2408 = vpop.permute.xlu0 %2407
        %2409 = vrot.lane.b32.xlu0 %v1913, 8
        %v2410 = vpop.permute.xlu0 %2409
        %2411 = vrot.lane.b32.xlu0 %v1916, 8
        %v2412 = vpop.permute.xlu0 %2411
        %2413 = vrot.lane.b32.xlu0 %v1960, 8
        %v2414 = vpop.permute.xlu0 %2413
        %2415 = vrot.lane.b32.xlu0 %v1963, 8
        %v2416 = vpop.permute.xlu0 %2415
        %2417 = vrot.lane.b32.xlu0 %v2007, 8
        %v2418 = vpop.permute.xlu0 %2417
        %2419 = vrot.lane.b32.xlu0 %v2010, 8
        %v2420 = vpop.permute.xlu0 %2419
        %2437 = vrot.lane.b32.xlu0 %v2058, 16
        %v2438 = vpop.permute.xlu0 %2437
        %2439 = vrot.lane.b32.xlu0 %v2061, 16
        %v2440 = vpop.permute.xlu0 %2439
        %2441 = vrot.lane.b32.xlu0 %v2105, 16
        %v2442 = vpop.permute.xlu0 %2441
        %2443 = vrot.lane.b32.xlu0 %v2108, 16
        %v2444 = vpop.permute.xlu0 %2443
        %2445 = vrot.lane.b32.xlu0 %v2152, 16
        %v2446 = vpop.permute.xlu0 %2445
        %2447 = vrot.lane.b32.xlu0 %v2155, 16
        %v2448 = vpop.permute.xlu0 %2447
        %2449 = vrot.lane.b32.xlu0 %v2199, 16
        %v2450 = vpop.permute.xlu0 %2449
        %2451 = vrot.lane.b32.xlu0 %v2202, 16
        %v2452 = vpop.permute.xlu0 %2451
        %2469 = vrot.lane.b32.xlu0 %v2250, 24
        %v2470 = vpop.permute.xlu0 %2469
        %2471 = vrot.lane.b32.xlu0 %v2253, 24
        %v2472 = vpop.permute.xlu0 %2471
        %2473 = vrot.lane.b32.xlu0 %v2297, 24
        %v2474 = vpop.permute.xlu0 %2473
        %2475 = vrot.lane.b32.xlu0 %v2300, 24
        %v2476 = vpop.permute.xlu0 %2475
        %2477 = vrot.lane.b32.xlu0 %v2344, 24
        %v2478 = vpop.permute.xlu0 %2477
        %2479 = vrot.lane.b32.xlu0 %v2347, 24
        %v2480 = vpop.permute.xlu0 %2479
        %2481 = vrot.lane.b32.xlu0 %v2391, 24
        %v2482 = vpop.permute.xlu0 %2481
        %2483 = vrot.lane.b32.xlu0 %v2394, 24
        %v2484 = vpop.permute.xlu0 %2483
        %v2493 = vsel %vm402, %v1674, %v2406
        %v2494 = vsel %vm402, %v1677, %v2408
        %v2495 = vsel %vm402, %v1721, %v2410
        %v2496 = vsel %vm402, %v1724, %v2412
        %v2497 = vsel %vm402, %v1768, %v2414
        %v2498 = vsel %vm402, %v1771, %v2416
        %v2499 = vsel %vm402, %v1815, %v2418
        %v2500 = vsel %vm402, %v1818, %v2420
        %v2501 = vsel %vm1276, %v2493, %v2438
        %v2502 = vsel %vm1276, %v2494, %v2440
        %v2503 = vsel %vm1276, %v2495, %v2442
        %v2504 = vsel %vm1276, %v2496, %v2444
        %v2505 = vsel %vm1276, %v2497, %v2446
        %v2506 = vsel %vm1276, %v2498, %v2448
        %v2507 = vsel %vm1276, %v2499, %v2450
        %v2508 = vsel %vm1276, %v2500, %v2452
        %vm2509 = vcmask 195584
        %v2510 = vsel %vm2509, %v2501, %v2470
        %v2511 = vsel %vm2509, %v2502, %v2472
        %v2512 = vsel %vm2509, %v2503, %v2474
        %v2513 = vsel %vm2509, %v2504, %v2476
        %v2514 = vsel %vm2509, %v2505, %v2478
        %v2515 = vsel %vm2509, %v2506, %v2480
        %v2516 = vsel %vm2509, %v2507, %v2482
        %v2517 = vsel %vm2509, %v2508, %v2484
        %v2518 = vpack.c.bf16 %v2511, %v2510
        %v2519 = vpack.c.bf16 %v2513, %v2512
        %v2520 = vpack.c.bf16 %v2515, %v2514
        %v2521 = vpack.c.bf16 %v2517, %v2516
        %v2522 = vld [vmem:[%s3] sm:$0xf]
        %v2523 = vld [vmem:[%s3 + $0x4] sm:$0xf]
        %v2524 = vld [vmem:[%s3 + $0x8] sm:$0xf]
        %v2525 = vld [vmem:[%s3 + $0xc] sm:$0xf]
        %v2526 = vld [vmem:[%s4] sm:$0x1]
        %v2528 = vlaneseq
        %v2529 = vshrl.u32 %v2528, 7
        %v2530 = vsub.s32 0, %v2529
        %v2531 = vrot.slane %v2526, %v2530
        %v2537 = vunpack.c.l.b16 %v2522
        %v2538 = vunpack.c.l.b16 %v2523
        %v2539 = vunpack.c.l.b16 %v2524
        %v2540 = vunpack.c.l.b16 %v2525
        %v2541 = vpack.c.b16 %v2538, %v2537
        %v2542 = vpack.c.b16 %v2540, %v2539
        %v2546 = vsel %vm317, %v2518, 0
        %v2549 = vsel %vm317, %v2519, 0
        %v2552 = vsel %vm317, %v2520, 0
        %v2555 = vsel %vm317, %v2521, 0
        %2557 = vmatprep.subr.bf16.mxu0 0
        %2558 = vmatpush1.bf16.msra.mxu0 %v2541
        %2559 = vmatprep.subr.bf16.mxu0 0
        %2560 = vmatpush1.bf16.msra.mxu0 %v2542
        %2561 = vmatprep.subr.bf16.mxu0 0
        %2562 = vmatpush1.bf16.msra.mxu0 0
        %2563 = vmatprep.subr.bf16.mxu0 0
        %2564 = vmatpush1.bf16.msra.mxu0 0
        %2565 = vmatprep.subr.bf16.mxu0 0
        %2566 = vmatpush1.bf16.msra.mxu0 0
        %2567 = vmatprep.subr.bf16.mxu0 0
        %2568 = vmatpush1.bf16.msra.mxu0 0
        %2569 = vmatprep.subr.bf16.mxu0 0
        %2570 = vmatpush1.bf16.msra.mxu0 0
        %2571 = vmatprep.subr.bf16.mxu0 0
        %2572 = vmatpush1.bf16.msra.mxu0 0
        %2573 = vmatprep.subr.bf16.mxu0 0
        %2574 = vmatpush1.bf16.msra.mxu0 0
        %2575 = vmatprep.subr.bf16.mxu0 0
        %2576 = vmatpush1.bf16.msra.mxu0 0
        %2577 = vmatprep.subr.bf16.mxu0 0
        %2578 = vmatpush1.bf16.msra.mxu0 0
        %2579 = vmatprep.subr.bf16.mxu0 0
        %2580 = vmatpush1.bf16.msra.mxu0 0
        %2581 = vmatprep.subr.bf16.mxu0 0
        %2582 = vmatpush1.bf16.msra.mxu0 0
        %2583 = vmatprep.subr.bf16.mxu0 0
        %2584 = vmatpush1.bf16.msra.mxu0 0
        %2585 = vmatprep.subr.bf16.mxu0 0
        %2586 = vmatpush1.bf16.msra.mxu0 0
        %2587 = vmatprep.subr.bf16.mxu0 0
        %2588 = vmatpush1.bf16.msra.mxu0 0
        %2589 = vmatprep.mubr.bf16.mxu0 0
        %2590 = vmatmul.mubr.bf16.gmra.mrb[0].mxu0 %v2546
        %v2591 = vpop.f32.mrb[0].mxu0
        %v2592 = vadd.f32 %v2531, %v2591
        %v2593 = vpop.f32.mrb[0].mxu0
        %v2594 = vpop.f32.mrb[0].mxu0
        %v2595 = vadd.f32 %v2531, %v2594
        %v2596 = vpop.f32.mrb[0].mxu0
        %2597 = vmatprep.mubr.bf16.mxu0 0
        %2598 = vmatmul.mubr.bf16.gmra.mrb[0].mxu0 %v2549
        %v2599 = vpop.f32.mrb[0].mxu0
        %v2600 = vadd.f32 %v2531, %v2599
        %v2601 = vpop.f32.mrb[0].mxu0
        %v2602 = vpop.f32.mrb[0].mxu0
        %v2603 = vadd.f32 %v2531, %v2602
        %v2604 = vpop.f32.mrb[0].mxu0
        %2605 = vmatprep.mubr.bf16.mxu0 0
        %2606 = vmatmul.mubr.bf16.gmra.mrb[0].mxu0 %v2552
        %v2607 = vpop.f32.mrb[0].mxu0
        %v2608 = vadd.f32 %v2531, %v2607
        %v2609 = vpop.f32.mrb[0].mxu0
        %v2610 = vpop.f32.mrb[0].mxu0
        %v2611 = vadd.f32 %v2531, %v2610
        %v2612 = vpop.f32.mrb[0].mxu0
        %2613 = vmatprep.mubr.bf16.mxu0 0
        %2614 = vmatmul.mubr.bf16.gmra.mrb[0].mxu0 %v2555
        %v2615 = vpop.f32.mrb[0].mxu0
        %v2616 = vadd.f32 %v2531, %v2615
        %v2617 = vpop.f32.mrb[0].mxu0
        %v2618 = vpop.f32.mrb[0].mxu0
        %v2619 = vadd.f32 %v2531, %v2618
        %v2620 = vpop.f32.mrb[0].mxu0
        %2621 = vdwg.mxu0
        %2622 = vst.msk [vmem:[%s265] sm:$0xff] %vm317, %v2592
        %2623 = vst.msk [vmem:[%s265 + $0x8] sm:$0xff] %vm317, %v2595
        %2624 = vst.msk [vmem:[%s265 + $0x10] sm:$0xff] %vm317, %v2600
        %2625 = vst.msk [vmem:[%s265 + $0x18] sm:$0xff] %vm317, %v2603
        %2626 = vst.msk [vmem:[%s265 + $0x20] sm:$0xff] %vm317, %v2608
        %2627 = vst.msk [vmem:[%s265 + $0x28] sm:$0xff] %vm317, %v2611
        %2628 = vst.msk [vmem:[%s265 + $0x30] sm:$0xff] %vm317, %v2616
        %2629 = vst.msk [vmem:[%s265 + $0x38] sm:$0xff] %vm317, %v2619
        %s2630 = sand.u32 %s164, 1
        %s2631 = scalar_lea.sflag [#allocation3], %s2630
        %s2632 = sand.u32 %s164, 1
        %s2633 = smul.addr %s2632, 64
        %s2634 = scalar_lea.vmem [#allocation2], %s2633
        // Predicated region
        $region45: #{tpu_custom_call.1} parent=43 // pred_check
          %p2635 = pneg %p174
        $region46: #{tpu_custom_call.1} parent=43 // pred_check_branch
          %2637 = sbr.rel (%p2635) target = $region48
        $region47: #{tpu_custom_call.1} parent=43 // pred_region
          %s2638 = smul.u32 4, %s20
          %s2640 = ssub.s32 1024, 1024
          %2641 = vsyncadd %s2631, %s2640
          %s2642 = smul.addr %s2638, 2
          %s2643 = smul.addr %s2642, 128
          %s2644 = scalar_lea.hbm %s6, %s2643
          %s2645 = sshll.u32 %s2634, 4
          %s2646 = int_to_ptr.vmem [resolvable:$true] %s2645
          %2651 = dma.vmem_to_hbm [thread:$0]  %s2646, 1024, %s2644, %s2631, 128, 128, 8
        $region48: #{tpu_custom_call.1} parent=43 // pred_fallthru
          _
      $region44: #{tpu_custom_call.1} parent=5 // pred_fallthru
        _
      %p2652 = scmp.le.s32.totalorder 2, %s15
      // Predicated region
      $region49: #{tpu_custom_call.1} parent=5 // pred_check
        %p2653 = pneg %p2652
      $region50: #{tpu_custom_call.1} parent=5 // pred_check_branch
        %2655 = sbr.rel (%p2653) target = $region52
      $region51: #{tpu_custom_call.1} parent=5 // pred_region
        %s2656 = ssub.s32 %s15, 2
        // Predicated region
        $region53: #{tpu_custom_call.1} parent=51 // pred_check
          %p2657 = pneg %p180
        $region54: #{tpu_custom_call.1} parent=51 // pred_check_branch
          %2659 = sbr.rel (%p2657) target = $region56
        $region55: #{tpu_custom_call.1} parent=51 // pred_region
          %s2660 = sand.u32 %s165, 1
          %s2661 = scalar_lea.sflag [#allocation3], %s2660
          %s2662 = sand.u32 %s165, 1
          %s2663 = smul.addr %s2662, 64
          %s2664 = scalar_lea.vmem [#allocation2], %s2663
          %2665 = dma.done %s2661, 1024
        $region56: #{tpu_custom_call.1} parent=51 // pred_fallthru
          _
      $region52: #{tpu_custom_call.1} parent=5 // pred_fallthru
        _
    $region6: #{tpu_custom_call.1} parent=1 // loop_footer
      %s19 = sadd.s32 1, %s15
    $region7: #{tpu_custom_call.1} parent=1 // loop_footer_branch
      %14 = sbr.rel target = $region3
    $region8: #{tpu_custom_call.1} parent=1 // loop_exit
      _
    %2666 = vsyncpa [#allocation3], 1
    %s2667 = scalar_lea.sflag [#allocation3], 1
    %2668 = vsyncpa %s2667, 1

</llo_original>
